<compile_context>
chip_gen: v7x
topology: tpu7x:2x2x1
jax: 0.10.0
libtpu: 0.0.40
codegen_flags: <defaults>
</compile_context>

<pallas_src>
import math
import functools

import jax
import jax.numpy as jnp
from jax import lax
from jax.experimental import pallas as pl
from jax.experimental.pallas import tpu as pltpu


# ----------------------------------------------------------------------------
# Kernel
# ----------------------------------------------------------------------------
def _layer_norm(v, g, b, eps=1e-5):
    # matches torch LayerNorm (biased variance), computed in fp32
    mu = jnp.mean(v, axis=-1, keepdims=True)
    var = jnp.mean((v - mu) ** 2, axis=-1, keepdims=True)
    return (v - mu) * lax.rsqrt(var + eps) * g + b


def _rab_kernel(n_head, tk, n_kv,
                x_ref, xq_ref, mask_ref,
                ln1g_ref, ln1b_ref,
                wq_ref, bq_ref, wk_ref, bk_ref, wv_ref, bv_ref,
                wo_ref, bo_ref,
                ln2g_ref, ln2b_ref,
                wfc_ref, bfc_ref, wproj_ref, bproj_ref,
                out_ref,
                k_sc, v_sc):
    D = x_ref.shape[2]
    TQ = xq_ref.shape[1]
    H = n_head
    hd = D // H
    qi = pl.program_id(1)

    # ---- K/V path: LN1(x_full) + K/V projection ONCE per batch element ----
    @pl.when(qi == 0)
    def _():
        x1 = _layer_norm(x_ref[0].astype(jnp.float32),
                         ln1g_ref[...], ln1b_ref[...]).astype(jnp.bfloat16)
        k = jnp.dot(x1, wk_ref[...], preferred_element_type=jnp.float32) + bk_ref[...]
        v = jnp.dot(x1, wv_ref[...], preferred_element_type=jnp.float32) + bv_ref[...]
        k_sc[...] = k.astype(jnp.bfloat16)
        v_sc[...] = v.astype(jnp.bfloat16)

    # ---- Q for this query tile (1/sqrt(hd) folded into wq/bq host-side) ----
    x_q = xq_ref[0].astype(jnp.float32)                               # (TQ, D)
    x1_q = _layer_norm(x_q, ln1g_ref[...], ln1b_ref[...]).astype(jnp.bfloat16)
    q = jnp.dot(x1_q, wq_ref[...], preferred_element_type=jnp.float32) + bq_ref[...]
    qh = q.astype(jnp.bfloat16).reshape(TQ, H, hd)                    # (TQ, H, hd)

    # ---- online softmax over KV tiles (deferred normalisation) ----
    def kv_step(off, t, carry):
        m, l, acc = carry
        k_t = k_sc[pl.ds(off, tk), :].reshape(tk, H, hd)              # bf16
        v_t = v_sc[pl.ds(off, tk), :].reshape(tk, H, hd)              # bf16
        bias = mask_ref[0, pl.ds(t, 1), :]                            # (1, tk) f32
        s = jnp.einsum("qhd,khd->hqk", qh, k_t,
                       preferred_element_type=jnp.float32)            # (H, TQ, tk)
        s = s + bias
        m_new = jnp.maximum(m, jnp.max(s, axis=-1, keepdims=True))
        alpha = jnp.exp(m - m_new)
        p = jnp.exp(s - m_new)
        l_new = alpha * l + jnp.sum(p, axis=-1, keepdims=True)
        acc_new = alpha * acc + jnp.einsum(
            "hqk,khd->hqd", p.astype(jnp.bfloat16), v_t,
            preferred_element_type=jnp.float32)
        return m_new, l_new, acc_new

    carry = (jnp.full((H, TQ, 1), -jnp.inf, jnp.float32),
             jnp.zeros((H, TQ, 1), jnp.float32),
             jnp.zeros((H, TQ, hd), jnp.float32))
    if n_kv <= 4:                       # short loops: unroll at trace time
        for t in range(n_kv):
            carry = kv_step(t * tk, t, carry)
    else:
        carry = lax.fori_loop(
            0, n_kv,
            lambda t, c: kv_step(pl.multiple_of(t * tk, tk), t, c),
            carry)
    _, l, acc = carry

    # deferred softmax normalisation: scale the (H, TQ, hd) accumulator only
    acc = (acc * pl.reciprocal(l, approx=True)).astype(jnp.bfloat16)

    # head merge folded into W_o: per-head batched matmul + sum over heads
    attn = jnp.einsum("hqd,hde->hqe", acc, wo_ref[...],
                      preferred_element_type=jnp.float32)             # (H, TQ, D)
    attn = jnp.sum(attn, axis=0) + bo_ref[...]
    xa = x_q + attn                                                   # (TQ, D) f32

    # ---- MLP: xa + c_proj(QuickGELU(c_fc(LN2(xa)))) ----
    x2 = _layer_norm(xa, ln2g_ref[...], ln2b_ref[...]).astype(jnp.bfloat16)
    h = jnp.dot(x2, wfc_ref[...], preferred_element_type=jnp.float32) + bfc_ref[...]
    # QuickGELU in f32, single cast to bf16 for the MXU operand
    # (flip the elementwise math to bf16 on v6e/v7x if VPU-bound).
    h = (h * jax.nn.sigmoid(1.702 * h)).astype(jnp.bfloat16)
    mlp = jnp.dot(h, wproj_ref[...], preferred_element_type=jnp.float32) + bproj_ref[...]

    out_ref[0] = (xa + mlp).astype(out_ref.dtype)


# ----------------------------------------------------------------------------
# Host-side helpers
# ----------------------------------------------------------------------------
def _vmem_capacity():
    try:
        return int(pltpu.get_tpu_info().vmem_capacity_bytes)
    except Exception:  # noqa: BLE001 - info query only; fall back to v5e/v6e size
        return 128 << 20


def _vmem_need_bytes(s_pad, d, t, h, x_itemsize):
    bf2, f4 = 2, 4
    hd = d // h
    weights = 2 * (12 * d * d * bf2 + 16 * d * f4)                  # double-buffered
    io = 2 * (s_pad * d * x_itemsize + 2 * t * d * x_itemsize + s_pad * f4)
    kv_scratch = 2 * s_pad * d * bf2
    kv_build = s_pad * d * (f4 + bf2) + 2 * s_pad * d * f4
    attn_work = 2 * h * t * t * f4 + 2 * h * t * hd * f4 + h * t * d * f4 + 6 * t * d * f4
    mlp_work = t * 4 * d * (2 * f4 + bf2) + 2 * t * d * f4
    return weights + io + kv_scratch + max(kv_build, attn_work + mlp_work)


def _choose_tiles(s, d, h, x_itemsize):
    """Pick the query/KV tile length from the per-chip VMEM budget.

    Returns (tile, s_pad) with s_pad a multiple of tile (s_pad == s when
    s <= 128, i.e. the whole sequence is one tile)."""
    if s <= 128:
        return s, s
    budget = int(0.75 * _vmem_capacity())
    for t in (512, 256, 128):
        s_pad = -(-s // t) * t
        if _vmem_need_bytes(s_pad, d, t, h, x_itemsize) <= budget:
            return t, s_pad
    return 128, -(-s // 128) * 128


def _vmem_limit(need_bytes):
    cap = _vmem_capacity()
    return int(max(32 << 20, min(int(need_bytes * 1.25) + (8 << 20), int(0.9 * cap))))


def pack_params(params, n_head):
    """Kernel weight layout: bf16 matmul operands, f32 biases / LN params,
    1/sqrt(head_dim) folded into the Q projection, W_o pre-reshaped to
    (H, hd, D) so the head merge is folded into the output projection."""
    D = params["w_qkv"].shape[0]
    assert D % n_head == 0, "d_model must be divisible by n_head"
    hd = D // n_head
    scale = 1.0 / math.sqrt(hd)

    def row(a):
        return jnp.asarray(a, jnp.float32).reshape(1, -1)

    w_qkv = jnp.asarray(params["w_qkv"], jnp.float32)
    b_qkv = jnp.asarray(params["b_qkv"], jnp.float32).reshape(-1)
    wq, wk, wv = w_qkv[:, :D], w_qkv[:, D:2 * D], w_qkv[:, 2 * D:]
    bq, bk, bv = b_qkv[:D], b_qkv[D:2 * D], b_qkv[2 * D:]
    wo_h = jnp.asarray(params["w_o"], jnp.float32).reshape(n_head, hd, D)

    return (
        row(params["ln1_g"]), row(params["ln1_b"]),
        (wq * scale).astype(jnp.bfloat16), row(bq * scale),
        wk.astype(jnp.bfloat16), row(bk),
        wv.astype(jnp.bfloat16), row(bv),
        wo_h.astype(jnp.bfloat16), row(params["b_o"]),
        row(params["ln2_g"]), row(params["ln2_b"]),
        jnp.asarray(params["w_fc"], jnp.float32).astype(jnp.bfloat16), row(params["b_fc"]),
        jnp.asarray(params["w_proj"], jnp.float32).astype(jnp.bfloat16), row(params["b_proj"]),
    )


# ----------------------------------------------------------------------------
# Wrappers
# ----------------------------------------------------------------------------
def residual_attention_block_bsd(x_bsd, params, n_head, x_mask=None):
    """Batch-first entry point (B, S, D) — no HBM transposes, no f32 upcast.
    x_mask: optional (B, S) bool/int key-padding mask, True = padded key."""
    B, S, D = x_bsd.shape
    assert D % n_head == 0
    itemsize = jnp.dtype(x_bsd.dtype).itemsize
    T, S_pad = _choose_tiles(S, D, n_head, itemsize)
    n_t = S_pad // T

    x = x_bsd
    if x_mask is None:
        bias = jnp.zeros((B, S), jnp.float32)
    else:
        bias = jnp.where(x_mask.astype(bool), -1e30, 0.0).astype(jnp.float32)
    if S_pad != S:
        x = jnp.pad(x, ((0, 0), (0, S_pad - S), (0, 0)))
        bias = jnp.pad(bias, ((0, 0), (0, S_pad - S)), constant_values=-1e30)
    mask_tiles = bias.reshape(B, n_t, T)

    weights = pack_params(params, n_head)

    in_specs = [
        pl.BlockSpec((1, S_pad, D), lambda b, qi: (b, 0, 0)),   # full seq (K/V build)
        pl.BlockSpec((1, T, D), lambda b, qi: (b, qi, 0)),      # query tile
        pl.BlockSpec((1, n_t, T), lambda b, qi: (b, 0, 0)),     # key-padding bias tiles
    ]
    for w in weights:                                           # resident weights
        in_specs.append(pl.BlockSpec(w.shape, lambda b, qi, _nd=w.ndim: (0,) * _nd))

    flops = 2 * B * (12 * S_pad * D * D + 2 * S_pad * S_pad * D)
    transcend = B * (n_head * S_pad * S_pad + 4 * S_pad * D)
    bytes_accessed = 2 * B * S_pad * D * itemsize + 24 * D * D + B * S_pad * 4

    need = _vmem_need_bytes(S_pad, D, T, n_head, itemsize)
    kern = functools.partial(_rab_kernel, n_head, T, n_t)
    out = pl.pallas_call(
        kern,
        out_shape=jax.ShapeDtypeStruct((B, S_pad, D), x_bsd.dtype),
        grid=(B, n_t),
        in_specs=in_specs,
        out_specs=pl.BlockSpec((1, T, D), lambda b, qi: (b, qi, 0)),
        scratch_shapes=[pltpu.VMEM((S_pad, D), jnp.bfloat16),   # K cache (per batch elem)
                        pltpu.VMEM((S_pad, D), jnp.bfloat16)],  # V cache
        compiler_params=pltpu.CompilerParams(
            # b parallel (megacore sharding on v7x); qi arbitrary so the
            # per-batch K/V scratch carries across query tiles.
            dimension_semantics=("parallel", "arbitrary"),
            vmem_limit_bytes=_vmem_limit(need)),
        cost_estimate=pl.CostEstimate(flops=int(flops),
                                      transcendentals=int(transcend),
                                      bytes_accessed=int(bytes_accessed)),
    )(x, x, mask_tiles, *weights)

    if S_pad != S:
        out = out[:, :S, :]
    return out


def residual_attention_block(x_sbd, params, n_head, x_mask=None):
    """Seq-first (S, B, D) entry matching torch nn.MultiheadAttention layout.
    Prefer residual_attention_block_bsd to avoid the two HBM transposes."""
    out = residual_attention_block_bsd(
        jnp.transpose(x_sbd, (1, 0, 2)), params, n_head, x_mask)
    return jnp.transpose(out, (1, 0, 2))


# ----------------------------------------------------------------------------
# Pure-JAX reference (fp32) for validation
# ----------------------------------------------------------------------------
def residual_attention_block_ref(x_sbd, params, n_head, x_mask=None):
    S, B, D = x_sbd.shape
    hd = D // n_head
    x = jnp.transpose(x_sbd, (1, 0, 2)).astype(jnp.float32)

    def ln(v, g, b, eps=1e-5):
        mu = jnp.mean(v, axis=-1, keepdims=True)
        var = jnp.mean((v - mu) ** 2, axis=-1, keepdims=True)
        return (v - mu) * jax.lax.rsqrt(var + eps) * g + b

    x1 = ln(x, params["ln1_g"], params["ln1_b"])
    qkv = x1 @ params["w_qkv"] + params["b_qkv"]
    q, k, v = jnp.split(qkv, 3, axis=-1)
    q = q.reshape(B, S, n_head, hd).transpose(0, 2, 1, 3) / math.sqrt(hd)
    k = k.reshape(B, S, n_head, hd).transpose(0, 2, 1, 3)
    v = v.reshape(B, S, n_head, hd).transpose(0, 2, 1, 3)
    s = jnp.einsum("bhqd,bhkd->bhqk", q, k)
    if x_mask is not None:
        s = s + jnp.where(x_mask.astype(bool), -1e30, 0.0)[:, None, None, :]
    p = jax.nn.softmax(s, axis=-1)
    a = jnp.einsum("bhqk,bhkd->bhqd", p, v).transpose(0, 2, 1, 3).reshape(B, S, D)
    x = x + a @ params["w_o"] + params["b_o"]
    x2 = ln(x, params["ln2_g"], params["ln2_b"])
    h = x2 @ params["w_fc"] + params["b_fc"]
    h = h * jax.nn.sigmoid(1.702 * h)
    x = x + h @ params["w_proj"] + params["b_proj"]
    return jnp.transpose(x, (1, 0, 2))


# ----------------------------------------------------------------------------
def make_params(key, d_model):
    ks = jax.random.split(key, 6)
    d4 = d_model * 4
    std = 0.02
    return {
        "ln1_g": jnp.ones((1, d_model), jnp.float32),
        "ln1_b": jnp.zeros((1, d_model), jnp.float32),
        "w_qkv": std * jax.random.normal(ks[0], (d_model, 3 * d_model), jnp.float32),
        "b_qkv": std * jax.random.normal(ks[1], (1, 3 * d_model), jnp.float32),
        "w_o":   std * jax.random.normal(ks[2], (d_model, d_model), jnp.float32),
        "b_o":   std * jax.random.normal(ks[3], (1, d_model), jnp.float32),
        "ln2_g": jnp.ones((1, d_model), jnp.float32),
        "ln2_b": jnp.zeros((1, d_model), jnp.float32),
        "w_fc":  std * jax.random.normal(ks[4], (d_model, d4), jnp.float32),
        "b_fc":  jnp.zeros((1, d4), jnp.float32),
        "w_proj": std * jax.random.normal(ks[5], (d4, d_model), jnp.float32),
        "b_proj": jnp.zeros((1, d_model), jnp.float32),
    }


if __name__ == "__main__":
    S, B, D, H = 8, 2, 32, 4
    key = jax.random.PRNGKey(0)
    kx, kp = jax.random.split(key)
    x = jax.random.normal(kx, (S, B, D), jnp.float32)
    params = make_params(kp, D)

    # TODO(synk): the module's additive (S,S) self.attn_mask is None in this
    # module's typical use and is not implemented; key_padding_mask is.

    # no key-padding mask (bf16 MXU path -> looser tolerance vs fp32 reference)
    out = jax.block_until_ready(residual_attention_block(x, params, n_head=H))
    ref = residual_attention_block_ref(x, params, n_head=H)
    assert out.shape == (S, B, D)
    assert jnp.allclose(out, ref, atol=2e-2, rtol=2e-2), (
        float(jnp.max(jnp.abs(out - ref))))

    # with a key-padding mask (last two keys of batch element 1 are padded)
    x_mask = jnp.zeros((B, S), jnp.int32).at[1, -2:].set(1)
    out_m = jax.block_until_ready(
        residual_attention_block(x, params, n_head=H, x_mask=x_mask))
    ref_m = residual_attention_block_ref(x, params, n_head=H, x_mask=x_mask)
    assert jnp.allclose(out_m, ref_m, atol=2e-2, rtol=2e-2), (
        float(jnp.max(jnp.abs(out_m - ref_m))))

    print("KERNEL_OK")
</pallas_src>

<mosaic_0001>
module attributes {stable_mosaic.version = 11 : i64} {
  func.func @_rab_kernel(%arg0: i32, %arg1: i32, %arg2: memref<1x8x32xf32, #tpu.memory_space<vmem>>, %arg3: memref<1x8x32xf32, #tpu.memory_space<vmem>>, %arg4: memref<1x1x8xf32, #tpu.memory_space<vmem>>, %arg5: memref<1x32xf32, #tpu.memory_space<vmem>>, %arg6: memref<1x32xf32, #tpu.memory_space<vmem>>, %arg7: memref<32x32xbf16, #tpu.memory_space<vmem>>, %arg8: memref<1x32xf32, #tpu.memory_space<vmem>>, %arg9: memref<32x32xbf16, #tpu.memory_space<vmem>>, %arg10: memref<1x32xf32, #tpu.memory_space<vmem>>, %arg11: memref<32x32xbf16, #tpu.memory_space<vmem>>, %arg12: memref<1x32xf32, #tpu.memory_space<vmem>>, %arg13: memref<4x8x32xbf16, #tpu.memory_space<vmem>>, %arg14: memref<1x32xf32, #tpu.memory_space<vmem>>, %arg15: memref<1x32xf32, #tpu.memory_space<vmem>>, %arg16: memref<1x32xf32, #tpu.memory_space<vmem>>, %arg17: memref<32x128xbf16, #tpu.memory_space<vmem>>, %arg18: memref<1x128xf32, #tpu.memory_space<vmem>>, %arg19: memref<128x32xbf16, #tpu.memory_space<vmem>>, %arg20: memref<1x32xf32, #tpu.memory_space<vmem>>, %arg21: memref<1x8x32xf32, #tpu.memory_space<vmem>>, %arg22: memref<8x32xbf16, #tpu.memory_space<vmem>>, %arg23: memref<8x32xbf16, #tpu.memory_space<vmem>>) attributes {dimension_semantics = [#tpu.dimension_semantics<parallel>, #tpu.dimension_semantics<arbitrary>], iteration_bounds = array<i64: 2, 1>, scalar_prefetch = 0 : i64, scratch_operands = 2 : i64, tpu.core_type = #tpu.core_type<tc>, window_params = [{transform_indices = @transform_0, window_bounds = array<i64: 1, 8, 32>}, {transform_indices = @transform_1, window_bounds = array<i64: 1, 8, 32>}, {transform_indices = @transform_2, window_bounds = array<i64: 1, 1, 8>}, {pipeline_mode = #tpu.pipeline_mode<synchronous>, transform_indices = @transform_3, window_bounds = array<i64: 1, 32>}, {pipeline_mode = #tpu.pipeline_mode<synchronous>, transform_indices = @transform_4, window_bounds = array<i64: 1, 32>}, {pipeline_mode = #tpu.pipeline_mode<synchronous>, transform_indices = @transform_5, window_bounds = array<i64: 32, 32>}, {pipeline_mode = #tpu.pipeline_mode<synchronous>, transform_indices = @transform_6, window_bounds = array<i64: 1, 32>}, {pipeline_mode = #tpu.pipeline_mode<synchronous>, transform_indices = @transform_7, window_bounds = array<i64: 32, 32>}, {pipeline_mode = #tpu.pipeline_mode<synchronous>, transform_indices = @transform_8, window_bounds = array<i64: 1, 32>}, {pipeline_mode = #tpu.pipeline_mode<synchronous>, transform_indices = @transform_9, window_bounds = array<i64: 32, 32>}, {pipeline_mode = #tpu.pipeline_mode<synchronous>, transform_indices = @transform_10, window_bounds = array<i64: 1, 32>}, {pipeline_mode = #tpu.pipeline_mode<synchronous>, transform_indices = @transform_11, window_bounds = array<i64: 4, 8, 32>}, {pipeline_mode = #tpu.pipeline_mode<synchronous>, transform_indices = @transform_12, window_bounds = array<i64: 1, 32>}, {pipeline_mode = #tpu.pipeline_mode<synchronous>, transform_indices = @transform_13, window_bounds = array<i64: 1, 32>}, {pipeline_mode = #tpu.pipeline_mode<synchronous>, transform_indices = @transform_14, window_bounds = array<i64: 1, 32>}, {pipeline_mode = #tpu.pipeline_mode<synchronous>, transform_indices = @transform_15, window_bounds = array<i64: 32, 128>}, {pipeline_mode = #tpu.pipeline_mode<synchronous>, transform_indices = @transform_16, window_bounds = array<i64: 1, 128>}, {pipeline_mode = #tpu.pipeline_mode<synchronous>, transform_indices = @transform_17, window_bounds = array<i64: 128, 32>}, {pipeline_mode = #tpu.pipeline_mode<synchronous>, transform_indices = @transform_18, window_bounds = array<i64: 1, 32>}, {transform_indices = @transform_19, window_bounds = array<i64: 1, 8, 32>}]} {
    %c0_i32 = arith.constant 0 : i32
    %0 = arith.cmpi eq, %arg1, %c0_i32 : i32
    %1 = arith.extui %0 : i1 to i32
    %c0_i32_0 = arith.constant 0 : i32
    %2 = arith.cmpi ne, %1, %c0_i32_0 : i32
    scf.if %2 {
      %c0_61 = arith.constant 0 : index
      %c0_62 = arith.constant 0 : index
      %c0_63 = arith.constant 0 : index
      %126 = vector.load %arg2[%c0_61, %c0_62, %c0_63] : memref<1x8x32xf32, #tpu.memory_space<vmem>>, vector<1x8x32xf32>
      %127 = vector.shape_cast %126 : vector<1x8x32xf32> to vector<8x32xf32>
      %c0_64 = arith.constant 0 : index
      %c0_65 = arith.constant 0 : index
      %128 = vector.load %arg5[%c0_64, %c0_65] : memref<1x32xf32, #tpu.memory_space<vmem>>, vector<1x32xf32>
      %c0_66 = arith.constant 0 : index
      %c0_67 = arith.constant 0 : index
      %129 = vector.load %arg6[%c0_66, %c0_67] : memref<1x32xf32, #tpu.memory_space<vmem>>, vector<1x32xf32>
      %cst_68 = arith.constant dense<0.000000e+00> : vector<8xf32>
      %130 = vector.multi_reduction <add>, %127, %cst_68 [1] : vector<8x32xf32> to vector<8xf32>
      %131 = vector.shape_cast %130 : vector<8xf32> to vector<8x1xf32>
      %cst_69 = arith.constant 3.200000e+01 : f32
      %132 = vector.broadcast %cst_69 : f32 to vector<8x1xf32>
      %133 = arith.divf %131, %132 : vector<8x1xf32>
      %134 = vector.broadcast %133 : vector<8x1xf32> to vector<8x32xf32>
      %135 = arith.subf %127, %134 : vector<8x32xf32>
      %136 = arith.mulf %135, %135 : vector<8x32xf32>
      %cst_70 = arith.constant dense<0.000000e+00> : vector<8xf32>
      %137 = vector.multi_reduction <add>, %136, %cst_70 [1] : vector<8x32xf32> to vector<8xf32>
      %138 = vector.shape_cast %137 : vector<8xf32> to vector<8x1xf32>
      %cst_71 = arith.constant 3.200000e+01 : f32
      %139 = vector.broadcast %cst_71 : f32 to vector<8x1xf32>
      %140 = arith.divf %138, %139 : vector<8x1xf32>
      %141 = vector.broadcast %133 : vector<8x1xf32> to vector<8x32xf32>
      %142 = arith.subf %127, %141 : vector<8x32xf32>
      %cst_72 = arith.constant 9.99999974E-6 : f32
      %143 = vector.broadcast %cst_72 : f32 to vector<8x1xf32>
      %144 = arith.addf %140, %143 : vector<8x1xf32>
      %145 = math.rsqrt %144 : vector<8x1xf32>
      %146 = vector.broadcast %145 : vector<8x1xf32> to vector<8x32xf32>
      %147 = arith.mulf %142, %146 : vector<8x32xf32>
      %148 = vector.broadcast %128 : vector<1x32xf32> to vector<8x32xf32>
      %149 = arith.mulf %147, %148 : vector<8x32xf32>
      %150 = vector.broadcast %129 : vector<1x32xf32> to vector<8x32xf32>
      %151 = arith.addf %149, %150 : vector<8x32xf32>
      %152 = arith.truncf %151 : vector<8x32xf32> to vector<8x32xbf16>
      %c0_73 = arith.constant 0 : index
      %c0_74 = arith.constant 0 : index
      %153 = vector.load %arg9[%c0_73, %c0_74] : memref<32x32xbf16, #tpu.memory_space<vmem>>, vector<32x32xbf16>
      %cst_75 = arith.constant dense<0.000000e+00> : vector<8x32xf32>
      %154 = tpu.matmul %152, %153, %cst_75 {dimension_numbers = #tpu.dot_dimension_numbers<[1], [0], [0], [1], [0, 0, 1, 1], [], []>} : vector<8x32xbf16>, vector<32x32xbf16>, vector<8x32xf32> -> vector<8x32xf32>
      %c0_76 = arith.constant 0 : index
      %c0_77 = arith.constant 0 : index
      %155 = vector.load %arg10[%c0_76, %c0_77] : memref<1x32xf32, #tpu.memory_space<vmem>>, vector<1x32xf32>
      %156 = vector.broadcast %155 : vector<1x32xf32> to vector<8x32xf32>
      %157 = arith.addf %154, %156 : vector<8x32xf32>
      %c0_78 = arith.constant 0 : index
      %c0_79 = arith.constant 0 : index
      %158 = vector.load %arg11[%c0_78, %c0_79] : memref<32x32xbf16, #tpu.memory_space<vmem>>, vector<32x32xbf16>
      %cst_80 = arith.constant dense<0.000000e+00> : vector<8x32xf32>
      %159 = tpu.matmul %152, %158, %cst_80 {dimension_numbers = #tpu.dot_dimension_numbers<[1], [0], [0], [1], [0, 0, 1, 1], [], []>} : vector<8x32xbf16>, vector<32x32xbf16>, vector<8x32xf32> -> vector<8x32xf32>
      %c0_81 = arith.constant 0 : index
      %c0_82 = arith.constant 0 : index
      %160 = vector.load %arg12[%c0_81, %c0_82] : memref<1x32xf32, #tpu.memory_space<vmem>>, vector<1x32xf32>
      %161 = vector.broadcast %160 : vector<1x32xf32> to vector<8x32xf32>
      %162 = arith.addf %159, %161 : vector<8x32xf32>
      %163 = arith.truncf %157 : vector<8x32xf32> to vector<8x32xbf16>
      %c0_83 = arith.constant 0 : index
      %c0_84 = arith.constant 0 : index
      %164 = vector.load %arg22[%c0_83, %c0_84] : memref<8x32xbf16, #tpu.memory_space<vmem>>, vector<8x32xbf16>
      tpu.vector_store %arg22[%c0_83, %c0_84], %163 {strides = array<i32>} : memref<8x32xbf16, #tpu.memory_space<vmem>>, vector<8x32xbf16>,
      %165 = arith.truncf %162 : vector<8x32xf32> to vector<8x32xbf16>
      %c0_85 = arith.constant 0 : index
      %c0_86 = arith.constant 0 : index
      %166 = vector.load %arg23[%c0_85, %c0_86] : memref<8x32xbf16, #tpu.memory_space<vmem>>, vector<8x32xbf16>
      tpu.vector_store %arg23[%c0_85, %c0_86], %165 {strides = array<i32>} : memref<8x32xbf16, #tpu.memory_space<vmem>>, vector<8x32xbf16>,
    } else {
    }
    %c0 = arith.constant 0 : index
    %c0_1 = arith.constant 0 : index
    %c0_2 = arith.constant 0 : index
    %3 = vector.load %arg3[%c0, %c0_1, %c0_2] : memref<1x8x32xf32, #tpu.memory_space<vmem>>, vector<1x8x32xf32>
    %4 = vector.shape_cast %3 : vector<1x8x32xf32> to vector<8x32xf32>
    %c0_3 = arith.constant 0 : index
    %c0_4 = arith.constant 0 : index
    %5 = vector.load %arg5[%c0_3, %c0_4] : memref<1x32xf32, #tpu.memory_space<vmem>>, vector<1x32xf32>
    %c0_5 = arith.constant 0 : index
    %c0_6 = arith.constant 0 : index
    %6 = vector.load %arg6[%c0_5, %c0_6] : memref<1x32xf32, #tpu.memory_space<vmem>>, vector<1x32xf32>
    %cst = arith.constant dense<0.000000e+00> : vector<8xf32>
    %7 = vector.multi_reduction <add>, %4, %cst [1] : vector<8x32xf32> to vector<8xf32>
    %8 = vector.shape_cast %7 : vector<8xf32> to vector<8x1xf32>
    %cst_7 = arith.constant 3.200000e+01 : f32
    %9 = vector.broadcast %cst_7 : f32 to vector<8x1xf32>
    %10 = arith.divf %8, %9 : vector<8x1xf32>
    %11 = vector.broadcast %10 : vector<8x1xf32> to vector<8x32xf32>
    %12 = arith.subf %4, %11 : vector<8x32xf32>
    %13 = arith.mulf %12, %12 : vector<8x32xf32>
    %cst_8 = arith.constant dense<0.000000e+00> : vector<8xf32>
    %14 = vector.multi_reduction <add>, %13, %cst_8 [1] : vector<8x32xf32> to vector<8xf32>
    %15 = vector.shape_cast %14 : vector<8xf32> to vector<8x1xf32>
    %cst_9 = arith.constant 3.200000e+01 : f32
    %16 = vector.broadcast %cst_9 : f32 to vector<8x1xf32>
    %17 = arith.divf %15, %16 : vector<8x1xf32>
    %18 = vector.broadcast %10 : vector<8x1xf32> to vector<8x32xf32>
    %19 = arith.subf %4, %18 : vector<8x32xf32>
    %cst_10 = arith.constant 9.99999974E-6 : f32
    %20 = vector.broadcast %cst_10 : f32 to vector<8x1xf32>
    %21 = arith.addf %17, %20 : vector<8x1xf32>
    %22 = math.rsqrt %21 : vector<8x1xf32>
    %23 = vector.broadcast %22 : vector<8x1xf32> to vector<8x32xf32>
    %24 = arith.mulf %19, %23 : vector<8x32xf32>
    %25 = vector.broadcast %5 : vector<1x32xf32> to vector<8x32xf32>
    %26 = arith.mulf %24, %25 : vector<8x32xf32>
    %27 = vector.broadcast %6 : vector<1x32xf32> to vector<8x32xf32>
    %28 = arith.addf %26, %27 : vector<8x32xf32>
    %29 = arith.truncf %28 : vector<8x32xf32> to vector<8x32xbf16>
    %c0_11 = arith.constant 0 : index
    %c0_12 = arith.constant 0 : index
    %30 = vector.load %arg7[%c0_11, %c0_12] : memref<32x32xbf16, #tpu.memory_space<vmem>>, vector<32x32xbf16>
    %cst_13 = arith.constant dense<0.000000e+00> : vector<8x32xf32>
    %31 = tpu.matmul %29, %30, %cst_13 {dimension_numbers = #tpu.dot_dimension_numbers<[1], [0], [0], [1], [0, 0, 1, 1], [], []>} : vector<8x32xbf16>, vector<32x32xbf16>, vector<8x32xf32> -> vector<8x32xf32>
    %c0_14 = arith.constant 0 : index
    %c0_15 = arith.constant 0 : index
    %32 = vector.load %arg8[%c0_14, %c0_15] : memref<1x32xf32, #tpu.memory_space<vmem>>, vector<1x32xf32>
    %33 = vector.broadcast %32 : vector<1x32xf32> to vector<8x32xf32>
    %34 = arith.addf %31, %33 : vector<8x32xf32>
    %35 = arith.truncf %34 : vector<8x32xf32> to vector<8x32xbf16>
    %36 = vector.shape_cast %35 : vector<8x32xbf16> to vector<8x4x8xbf16>
    %cst_16 = arith.constant 0xFF800000 : f32
    %37 = vector.broadcast %cst_16 : f32 to vector<4x8x1xf32>
    %cst_17 = arith.constant 0.000000e+00 : f32
    %38 = vector.broadcast %cst_17 : f32 to vector<4x8x1xf32>
    %cst_18 = arith.constant 0.000000e+00 : f32
    %39 = vector.broadcast %cst_18 : f32 to vector<4x8x8xf32>
    %c0_19 = arith.constant 0 : index
    %c0_20 = arith.constant 0 : index
    %40 = vector.load %arg22[%c0_19, %c0_20] : memref<8x32xbf16, #tpu.memory_space<vmem>>, vector<8x32xbf16>
    %41 = vector.shape_cast %40 : vector<8x32xbf16> to vector<8x4x8xbf16>
    %c0_21 = arith.constant 0 : index
    %c0_22 = arith.constant 0 : index
    %42 = vector.load %arg23[%c0_21, %c0_22] : memref<8x32xbf16, #tpu.memory_space<vmem>>, vector<8x32xbf16>
    %43 = vector.shape_cast %42 : vector<8x32xbf16> to vector<8x4x8xbf16>
    %c0_23 = arith.constant 0 : index
    %c0_24 = arith.constant 0 : index
    %c0_25 = arith.constant 0 : index
    %44 = vector.load %arg4[%c0_23, %c0_24, %c0_25] : memref<1x1x8xf32, #tpu.memory_space<vmem>>, vector<1x1x8xf32>
    %45 = vector.shape_cast %44 : vector<1x1x8xf32> to vector<1x8xf32>
    "tpu.trace_start"() <{level = 10 : i32, message = "qhd,khd->hqk"}> : () -> ()
    %cst_26 = arith.constant dense<0.000000e+00> : vector<4x8x8xf32>
    %46 = tpu.matmul %36, %41, %cst_26 {dimension_numbers = #tpu.dot_dimension_numbers<[2], [2], [0], [0], [0, 1, 0, 0, 1, 0], [1], [1]>} : vector<8x4x8xbf16>, vector<8x4x8xbf16>, vector<4x8x8xf32> -> vector<4x8x8xf32>
    "tpu.trace_stop"() : () -> ()
    %47 = vector.shape_cast %45 : vector<1x8xf32> to vector<1x1x8xf32>
    %48 = vector.broadcast %47 : vector<1x1x8xf32> to vector<4x8x8xf32>
    %49 = arith.addf %46, %48 : vector<4x8x8xf32>
    %cst_27 = arith.constant dense<0xFF800000> : vector<4x8xf32>
    %50 = vector.multi_reduction <maximumf>, %49, %cst_27 [2] : vector<4x8x8xf32> to vector<4x8xf32>
    %51 = vector.shape_cast %50 : vector<4x8xf32> to vector<4x8x1xf32>
    %52 = arith.maximumf %37, %51 : vector<4x8x1xf32>
    %53 = arith.subf %37, %52 : vector<4x8x1xf32>
    %54 = math.exp %53 : vector<4x8x1xf32>
    %55 = vector.broadcast %52 : vector<4x8x1xf32> to vector<4x8x8xf32>
    %56 = arith.subf %49, %55 : vector<4x8x8xf32>
    %57 = math.exp %56 : vector<4x8x8xf32>
    %58 = arith.mulf %54, %38 : vector<4x8x1xf32>
    %cst_28 = arith.constant dense<0.000000e+00> : vector<4x8xf32>
    %59 = vector.multi_reduction <add>, %57, %cst_28 [2] : vector<4x8x8xf32> to vector<4x8xf32>
    %60 = vector.shape_cast %59 : vector<4x8xf32> to vector<4x8x1xf32>
    %61 = arith.addf %58, %60 : vector<4x8x1xf32>
    %62 = vector.broadcast %54 : vector<4x8x1xf32> to vector<4x8x8xf32>
    %63 = arith.mulf %62, %39 : vector<4x8x8xf32>
    %64 = arith.truncf %57 : vector<4x8x8xf32> to vector<4x8x8xbf16>
    "tpu.trace_start"() <{level = 10 : i32, message = "hqk,khd->hqd"}> : () -> ()
    %cst_29 = arith.constant dense<0.000000e+00> : vector<4x8x8xf32>
    %65 = tpu.matmul %64, %43, %cst_29 {dimension_numbers = #tpu.dot_dimension_numbers<[2], [0], [1], [2], [0, 0, 0, 1, 1, 2], [0], [1]>} : vector<4x8x8xbf16>, vector<8x4x8xbf16>, vector<4x8x8xf32> -> vector<4x8x8xf32>
    "tpu.trace_stop"() : () -> ()
    %66 = arith.addf %63, %65 : vector<4x8x8xf32>
    %67 = tpu.reciprocal %61 {approx = true} : vector<4x8x1xf32> -> vector<4x8x1xf32>
    %68 = vector.broadcast %67 : vector<4x8x1xf32> to vector<4x8x8xf32>
    %69 = arith.mulf %66, %68 : vector<4x8x8xf32>
    %70 = arith.truncf %69 : vector<4x8x8xf32> to vector<4x8x8xbf16>
    %c0_30 = arith.constant 0 : index
    %c0_31 = arith.constant 0 : index
    %c0_32 = arith.constant 0 : index
    %71 = vector.load %arg13[%c0_30, %c0_31, %c0_32] : memref<4x8x32xbf16, #tpu.memory_space<vmem>>, vector<4x8x32xbf16>
    "tpu.trace_start"() <{level = 10 : i32, message = "hqd,hde->hqe"}> : () -> ()
    %cst_33 = arith.constant dense<0.000000e+00> : vector<4x8x32xf32>
    %72 = tpu.matmul %70, %71, %cst_33 {dimension_numbers = #tpu.dot_dimension_numbers<[2], [1], [1], [2], [0, 0, 0, 1, 1, 2], [0], [0]>} : vector<4x8x8xbf16>, vector<4x8x32xbf16>, vector<4x8x32xf32> -> vector<4x8x32xf32>
    "tpu.trace_stop"() : () -> ()
    %cst_34 = arith.constant dense<0.000000e+00> : vector<8x32xf32>
    %73 = vector.multi_reduction <add>, %72, %cst_34 [0] : vector<4x8x32xf32> to vector<8x32xf32>
    %c0_35 = arith.constant 0 : index
    %c0_36 = arith.constant 0 : index
    %74 = vector.load %arg14[%c0_35, %c0_36] : memref<1x32xf32, #tpu.memory_space<vmem>>, vector<1x32xf32>
    %75 = vector.broadcast %74 : vector<1x32xf32> to vector<8x32xf32>
    %76 = arith.addf %73, %75 : vector<8x32xf32>
    %77 = arith.addf %4, %76 : vector<8x32xf32>
    %c0_37 = arith.constant 0 : index
    %c0_38 = arith.constant 0 : index
    %78 = vector.load %arg15[%c0_37, %c0_38] : memref<1x32xf32, #tpu.memory_space<vmem>>, vector<1x32xf32>
    %c0_39 = arith.constant 0 : index
    %c0_40 = arith.constant 0 : index
    %79 = vector.load %arg16[%c0_39, %c0_40] : memref<1x32xf32, #tpu.memory_space<vmem>>, vector<1x32xf32>
    %cst_41 = arith.constant dense<0.000000e+00> : vector<8xf32>
    %80 = vector.multi_reduction <add>, %77, %cst_41 [1] : vector<8x32xf32> to vector<8xf32>
    %81 = vector.shape_cast %80 : vector<8xf32> to vector<8x1xf32>
    %cst_42 = arith.constant 3.200000e+01 : f32
    %82 = vector.broadcast %cst_42 : f32 to vector<8x1xf32>
    %83 = arith.divf %81, %82 : vector<8x1xf32>
    %84 = vector.broadcast %83 : vector<8x1xf32> to vector<8x32xf32>
    %85 = arith.subf %77, %84 : vector<8x32xf32>
    %86 = arith.mulf %85, %85 : vector<8x32xf32>
    %cst_43 = arith.constant dense<0.000000e+00> : vector<8xf32>
    %87 = vector.multi_reduction <add>, %86, %cst_43 [1] : vector<8x32xf32> to vector<8xf32>
    %88 = vector.shape_cast %87 : vector<8xf32> to vector<8x1xf32>
    %cst_44 = arith.constant 3.200000e+01 : f32
    %89 = vector.broadcast %cst_44 : f32 to vector<8x1xf32>
    %90 = arith.divf %88, %89 : vector<8x1xf32>
    %91 = vector.broadcast %83 : vector<8x1xf32> to vector<8x32xf32>
    %92 = arith.subf %77, %91 : vector<8x32xf32>
    %cst_45 = arith.constant 9.99999974E-6 : f32
    %93 = vector.broadcast %cst_45 : f32 to vector<8x1xf32>
    %94 = arith.addf %90, %93 : vector<8x1xf32>
    %95 = math.rsqrt %94 : vector<8x1xf32>
    %96 = vector.broadcast %95 : vector<8x1xf32> to vector<8x32xf32>
    %97 = arith.mulf %92, %96 : vector<8x32xf32>
    %98 = vector.broadcast %78 : vector<1x32xf32> to vector<8x32xf32>
    %99 = arith.mulf %97, %98 : vector<8x32xf32>
    %100 = vector.broadcast %79 : vector<1x32xf32> to vector<8x32xf32>
    %101 = arith.addf %99, %100 : vector<8x32xf32>
    %102 = arith.truncf %101 : vector<8x32xf32> to vector<8x32xbf16>
    %c0_46 = arith.constant 0 : index
    %c0_47 = arith.constant 0 : index
    %103 = vector.load %arg17[%c0_46, %c0_47] : memref<32x128xbf16, #tpu.memory_space<vmem>>, vector<32x128xbf16>
    %cst_48 = arith.constant dense<0.000000e+00> : vector<8x128xf32>
    %104 = tpu.matmul %102, %103, %cst_48 {dimension_numbers = #tpu.dot_dimension_numbers<[1], [0], [0], [1], [0, 0, 1, 1], [], []>} : vector<8x32xbf16>, vector<32x128xbf16>, vector<8x128xf32> -> vector<8x128xf32>
    %c0_49 = arith.constant 0 : index
    %c0_50 = arith.constant 0 : index
    %105 = vector.load %arg18[%c0_49, %c0_50] : memref<1x128xf32, #tpu.memory_space<vmem>>, vector<1x128xf32>
    %106 = vector.broadcast %105 : vector<1x128xf32> to vector<8x128xf32>
    %107 = arith.addf %104, %106 : vector<8x128xf32>
    %cst_51 = arith.constant 1.702000e+00 : f32
    %108 = vector.broadcast %cst_51 : f32 to vector<8x128xf32>
    %109 = arith.mulf %108, %107 : vector<8x128xf32>
    %110 = arith.negf %109 : vector<8x128xf32>
    %111 = math.exp %110 : vector<8x128xf32>
    %cst_52 = arith.constant 1.000000e+00 : f32
    %112 = vector.broadcast %cst_52 : f32 to vector<8x128xf32>
    %113 = arith.addf %112, %111 : vector<8x128xf32>
    %114 = arith.divf %112, %113 : vector<8x128xf32>
    %115 = arith.mulf %107, %114 : vector<8x128xf32>
    %116 = arith.truncf %115 : vector<8x128xf32> to vector<8x128xbf16>
    %c0_53 = arith.constant 0 : index
    %c0_54 = arith.constant 0 : index
    %117 = vector.load %arg19[%c0_53, %c0_54] : memref<128x32xbf16, #tpu.memory_space<vmem>>, vector<128x32xbf16>
    %cst_55 = arith.constant dense<0.000000e+00> : vector<8x32xf32>
    %118 = tpu.matmul %116, %117, %cst_55 {dimension_numbers = #tpu.dot_dimension_numbers<[1], [0], [0], [1], [0, 0, 1, 1], [], []>} : vector<8x128xbf16>, vector<128x32xbf16>, vector<8x32xf32> -> vector<8x32xf32>
    %c0_56 = arith.constant 0 : index
    %c0_57 = arith.constant 0 : index
    %119 = vector.load %arg20[%c0_56, %c0_57] : memref<1x32xf32, #tpu.memory_space<vmem>>, vector<1x32xf32>
    %120 = vector.broadcast %119 : vector<1x32xf32> to vector<8x32xf32>
    %121 = arith.addf %118, %120 : vector<8x32xf32>
    %122 = arith.addf %77, %121 : vector<8x32xf32>
    %c0_58 = arith.constant 0 : index
    %c0_59 = arith.constant 0 : index
    %c0_60 = arith.constant 0 : index
    %123 = vector.load %arg21[%c0_58, %c0_59, %c0_60] : memref<1x8x32xf32, #tpu.memory_space<vmem>>, vector<1x8x32xf32>
    %124 = vector.shape_cast %123 : vector<1x8x32xf32> to vector<8x32xf32>
    %125 = vector.shape_cast %122 : vector<8x32xf32> to vector<1x8x32xf32>
    tpu.vector_store %arg21[%c0_58, %c0_59, %c0_60], %125 {strides = array<i32>} : memref<1x8x32xf32, #tpu.memory_space<vmem>>, vector<1x8x32xf32>,
    return
  }
  func.func @transform_0(%arg0: i32, %arg1: i32) -> (i32, i32, i32) {
    %c0_i32 = arith.constant 0 : i32
    %c0_i32_0 = arith.constant 0 : i32
    %c0_i32_1 = arith.constant 0 : i32
    return %arg0, %c0_i32, %c0_i32_0 : i32, i32, i32
  }
  func.func @transform_1(%arg0: i32, %arg1: i32) -> (i32, i32, i32) {
    %c0_i32 = arith.constant 0 : i32
    %c0_i32_0 = arith.constant 0 : i32
    return %arg0, %arg1, %c0_i32 : i32, i32, i32
  }
  func.func @transform_2(%arg0: i32, %arg1: i32) -> (i32, i32, i32) {
    %c0_i32 = arith.constant 0 : i32
    %c0_i32_0 = arith.constant 0 : i32
    %c0_i32_1 = arith.constant 0 : i32
    return %arg0, %c0_i32, %c0_i32_0 : i32, i32, i32
  }
  func.func @transform_3(%arg0: i32, %arg1: i32) -> (i32, i32) {
    %c0_i32 = arith.constant 0 : i32
    %c0_i32_0 = arith.constant 0 : i32
    %c0_i32_1 = arith.constant 0 : i32
    return %c0_i32, %c0_i32_0 : i32, i32
  }
  func.func @transform_4(%arg0: i32, %arg1: i32) -> (i32, i32) {
    %c0_i32 = arith.constant 0 : i32
    %c0_i32_0 = arith.constant 0 : i32
    %c0_i32_1 = arith.constant 0 : i32
    return %c0_i32, %c0_i32_0 : i32, i32
  }
  func.func @transform_5(%arg0: i32, %arg1: i32) -> (i32, i32) {
    %c0_i32 = arith.constant 0 : i32
    %c0_i32_0 = arith.constant 0 : i32
    %c0_i32_1 = arith.constant 0 : i32
    return %c0_i32, %c0_i32_0 : i32, i32
  }
  func.func @transform_6(%arg0: i32, %arg1: i32) -> (i32, i32) {
    %c0_i32 = arith.constant 0 : i32
    %c0_i32_0 = arith.constant 0 : i32
    %c0_i32_1 = arith.constant 0 : i32
    return %c0_i32, %c0_i32_0 : i32, i32
  }
  func.func @transform_7(%arg0: i32, %arg1: i32) -> (i32, i32) {
    %c0_i32 = arith.constant 0 : i32
    %c0_i32_0 = arith.constant 0 : i32
    %c0_i32_1 = arith.constant 0 : i32
    return %c0_i32, %c0_i32_0 : i32, i32
  }
  func.func @transform_8(%arg0: i32, %arg1: i32) -> (i32, i32) {
    %c0_i32 = arith.constant 0 : i32
    %c0_i32_0 = arith.constant 0 : i32
    %c0_i32_1 = arith.constant 0 : i32
    return %c0_i32, %c0_i32_0 : i32, i32
  }
  func.func @transform_9(%arg0: i32, %arg1: i32) -> (i32, i32) {
    %c0_i32 = arith.constant 0 : i32
    %c0_i32_0 = arith.constant 0 : i32
    %c0_i32_1 = arith.constant 0 : i32
    return %c0_i32, %c0_i32_0 : i32, i32
  }
  func.func @transform_10(%arg0: i32, %arg1: i32) -> (i32, i32) {
    %c0_i32 = arith.constant 0 : i32
    %c0_i32_0 = arith.constant 0 : i32
    %c0_i32_1 = arith.constant 0 : i32
    return %c0_i32, %c0_i32_0 : i32, i32
  }
  func.func @transform_11(%arg0: i32, %arg1: i32) -> (i32, i32, i32) {
    %c0_i32 = arith.constant 0 : i32
    %c0_i32_0 = arith.constant 0 : i32
    %c0_i32_1 = arith.constant 0 : i32
    %c0_i32_2 = arith.constant 0 : i32
    return %c0_i32, %c0_i32_0, %c0_i32_1 : i32, i32, i32
  }
  func.func @transform_12(%arg0: i32, %arg1: i32) -> (i32, i32) {
    %c0_i32 = arith.constant 0 : i32
    %c0_i32_0 = arith.constant 0 : i32
    %c0_i32_1 = arith.constant 0 : i32
    return %c0_i32, %c0_i32_0 : i32, i32
  }
  func.func @transform_13(%arg0: i32, %arg1: i32) -> (i32, i32) {
    %c0_i32 = arith.constant 0 : i32
    %c0_i32_0 = arith.constant 0 : i32
    %c0_i32_1 = arith.constant 0 : i32
    return %c0_i32, %c0_i32_0 : i32, i32
  }
  func.func @transform_14(%arg0: i32, %arg1: i32) -> (i32, i32) {
    %c0_i32 = arith.constant 0 : i32
    %c0_i32_0 = arith.constant 0 : i32
    %c0_i32_1 = arith.constant 0 : i32
    return %c0_i32, %c0_i32_0 : i32, i32
  }
  func.func @transform_15(%arg0: i32, %arg1: i32) -> (i32, i32) {
    %c0_i32 = arith.constant 0 : i32
    %c0_i32_0 = arith.constant 0 : i32
    %c0_i32_1 = arith.constant 0 : i32
    return %c0_i32, %c0_i32_0 : i32, i32
  }
  func.func @transform_16(%arg0: i32, %arg1: i32) -> (i32, i32) {
    %c0_i32 = arith.constant 0 : i32
    %c0_i32_0 = arith.constant 0 : i32
    %c0_i32_1 = arith.constant 0 : i32
    return %c0_i32, %c0_i32_0 : i32, i32
  }
  func.func @transform_17(%arg0: i32, %arg1: i32) -> (i32, i32) {
    %c0_i32 = arith.constant 0 : i32
    %c0_i32_0 = arith.constant 0 : i32
    %c0_i32_1 = arith.constant 0 : i32
    return %c0_i32, %c0_i32_0 : i32, i32
  }
  func.func @transform_18(%arg0: i32, %arg1: i32) -> (i32, i32) {
    %c0_i32 = arith.constant 0 : i32
    %c0_i32_0 = arith.constant 0 : i32
    %c0_i32_1 = arith.constant 0 : i32
    return %c0_i32, %c0_i32_0 : i32, i32
  }
  func.func @transform_19(%arg0: i32, %arg1: i32) -> (i32, i32, i32) {
    %c0_i32 = arith.constant 0 : i32
    %c0_i32_0 = arith.constant 0 : i32
    return %arg0, %arg1, %c0_i32 : i32, i32, i32
  }
}

</mosaic_0001>

<llo_original>
// kernel: tpu_custom_call.1
$region0: #{tpu_custom_call.1}
  #allocation0 [shape = 'u32[]', space=smem, size = 0x4, offset = 0x4, fixed_abs, tag = 'smem constant byte address 0x4 - core index']
  #allocation1 [shape = 'u32[144,128]{1,0:T(1,128)}', space=vmem, size = 0x12000, scoped, tag = 'internal scratch']
  #allocation2 [shape = 'bf16[8,32]{1,0:T(8,128)(2,1)}', space=vmem, size = 0x800, scoped, tag = 'scratch operand']
  #allocation3 [shape = 'bf16[8,32]{1,0:T(8,128)(2,1)}', space=vmem, size = 0x800, scoped, tag = 'scratch operand']
  %s0 = inlined_call_operand.vmem [shape: f32[2,8,32], index: 0, kind: input, shape index: {}]
  %s1 = inlined_call_operand.vmem [shape: f32[2,8,32], index: 1, kind: input, shape index: {}]
  %s2 = inlined_call_operand.hbm [shape: f32[2,1,8], index: 2, kind: input, shape index: {}]
  %s3 = inlined_call_operand.vmem [shape: f32[1,32], index: 3, kind: input, shape index: {}]
  %s4 = inlined_call_operand.hbm [shape: f32[1,32], index: 4, kind: input, shape index: {}]
  %s5 = inlined_call_operand.vmem [shape: bf16[32,32], index: 5, kind: input, shape index: {}]
  %s6 = inlined_call_operand.hbm [shape: f32[1,32], index: 6, kind: input, shape index: {}]
  %s7 = inlined_call_operand.vmem [shape: bf16[32,32], index: 7, kind: input, shape index: {}]
  %s8 = inlined_call_operand.hbm [shape: f32[1,32], index: 8, kind: input, shape index: {}]
  %s9 = inlined_call_operand.vmem [shape: bf16[32,32], index: 9, kind: input, shape index: {}]
  %s10 = inlined_call_operand.hbm [shape: f32[1,32], index: 10, kind: input, shape index: {}]
  %s11 = inlined_call_operand.vmem [shape: bf16[4,8,32], index: 11, kind: input, shape index: {}]
  %s12 = inlined_call_operand.hbm [shape: f32[1,32], index: 12, kind: input, shape index: {}]
  %s13 = inlined_call_operand.hbm [shape: f32[1,32], index: 13, kind: input, shape index: {}]
  %s14 = inlined_call_operand.vmem [shape: f32[1,32], index: 14, kind: input, shape index: {}]
  %s15 = inlined_call_operand.vmem [shape: bf16[32,128], index: 15, kind: input, shape index: {}]
  %s16 = inlined_call_operand.vmem [shape: f32[1,128], index: 16, kind: input, shape index: {}]
  %s17 = inlined_call_operand.vmem [shape: bf16[128,32], index: 17, kind: input, shape index: {}]
  %s18 = inlined_call_operand.vmem [shape: f32[1,32], index: 18, kind: input, shape index: {}]
  %s19 = inlined_call_operand.hbm [shape: f32[2,8,32], index: 19, kind: output, shape index: {}]
  %s20 = sld [smem:[#allocation0]]
  $region141: #{tpu_custom_call.1} parent=0
    _
  %s22 = ssub.s32 1, %s20
  %s23 = scalar_select 0, %s22, %s20
  $region1: #{tpu_custom_call.1} parent=0
    #allocation4 [shape = 'u8[1024]{0}', space=vmem, size = 0x400, scoped, tag = 'input window, operand 2']
    #allocation5 [shape = 's32[2]{0}', space=sflag, size = 0x8, scoped, tag = 'scoped memory for tpu_custom_call.1']
    #allocation6 [shape = 's32[2]{0}', space=sflag, size = 0x8, scoped, tag = 'scoped memory for tpu_custom_call.1']
    #allocation7 [shape = 'u8[512]{0}', space=vmem, size = 0x400, scoped, tag = 'input window, operand 4, single buffered']
    #allocation8 [shape = 's32[1]{0}', space=sflag, size = 0x4, scoped, tag = 'scoped memory for tpu_custom_call.1']
    #allocation9 [shape = 'u8[512]{0}', space=vmem, size = 0x400, scoped, tag = 'input window, operand 6, single buffered']
    #allocation10 [shape = 'u8[512]{0}', space=vmem, size = 0x400, scoped, tag = 'input window, operand 8, single buffered']
    #allocation11 [shape = 's32[1]{0}', space=sflag, size = 0x4, scoped, tag = 'scoped memory for tpu_custom_call.1']
    #allocation12 [shape = 'u8[512]{0}', space=vmem, size = 0x400, scoped, tag = 'input window, operand 10, single buffered']
    #allocation13 [shape = 'u8[512]{0}', space=vmem, size = 0x400, scoped, tag = 'input window, operand 12, single buffered']
    #allocation14 [shape = 's32[1]{0}', space=sflag, size = 0x4, scoped, tag = 'scoped memory for tpu_custom_call.1']
    #allocation15 [shape = 'u8[512]{0}', space=vmem, size = 0x400, scoped, tag = 'input window, operand 13, single buffered']
    #allocation16 [shape = 'u8[8192]{0}', space=vmem, size = 0x2000, scoped, tag = 'output window, operand 0']
    %24 = vsyncpa [#allocation5], 0
    %s25 = scalar_lea.sflag [#allocation5], 1
    %26 = vsyncpa %s25, 0
    %27 = vsyncpa [#allocation8], 0
    %28 = vsyncpa [#allocation11], 0
    %29 = vsyncpa [#allocation14], 0
    %30 = vsyncpa [#allocation6], 0
    %s31 = scalar_lea.sflag [#allocation6], 1
    %32 = vsyncpa %s31, 0
    loop: start=0, step=1, limit=4
    $region2: #{tpu_custom_call.1} parent=1 // loop_pre_header
      _
    $region3: #{tpu_custom_call.1} parent=1 // loop_header
      %s34 = sphi 0, %s38
      %p35 = scmp.ge.s32.totalorder %s34, 4
      %s41 = sphi 0, %s53
      %s42 = sphi 0, %s49
      %s43 = sphi 0, %s41
      %s44 = sphi 0, %s42
      %s45 = sphi 0, %s43
      %s46 = sphi 0, %s44
      %s56 = sphi 0, %s58
      %s59 = sphi 0, %s56
      %s60 = sphi 0, %s59
      %s76 = sphi 0, %s60
      %s84 = sphi 0, %s86
      %s87 = sphi 0, %s84
      %s88 = sphi 0, %s87
      %s104 = sphi 0, %s88
      %s110 = sphi 0, %s112
      %s113 = sphi 0, %s110
      %s114 = sphi 0, %s113
      %s130 = sphi 0, %s114
      %s134 = sphi 0, %s134
      %s136 = sphi 0, %s134
      %s137 = sphi 0, %s136
      %s151 = sphi 0, %s137
      %s155 = sphi 0, %s155
      %s157 = sphi 0, %s155
      %s158 = sphi 0, %s157
      %s172 = sphi 0, %s158
      %s176 = sphi 0, %s176
      %s178 = sphi 0, %s176
      %s179 = sphi 0, %s178
      %s193 = sphi 0, %s179
      %s197 = sphi 0, %s197
      %s199 = sphi 0, %s197
      %s200 = sphi 0, %s199
      %s214 = sphi 0, %s200
      %s218 = sphi 0, %s218
      %s220 = sphi 0, %s218
      %s221 = sphi 0, %s220
      %s235 = sphi 0, %s221
      %s239 = sphi 0, %s239
      %s241 = sphi 0, %s239
      %s242 = sphi 0, %s241
      %s256 = sphi 0, %s242
      %s260 = sphi 0, %s260
      %s262 = sphi 0, %s260
      %s263 = sphi 0, %s262
      %s277 = sphi 0, %s263
      %s281 = sphi 0, %s281
      %s283 = sphi 0, %s281
      %s284 = sphi 0, %s283
      %s298 = sphi 0, %s284
      %s302 = sphi 0, %s302
      %s304 = sphi 0, %s302
      %s305 = sphi 0, %s304
      %s319 = sphi 0, %s305
      %s323 = sphi 0, %s323
      %s325 = sphi 0, %s323
      %s326 = sphi 0, %s325
      %s340 = sphi 0, %s326
      %s344 = sphi 0, %s344
      %s346 = sphi 0, %s344
      %s347 = sphi 0, %s346
      %s361 = sphi 0, %s347
      %s365 = sphi 0, %s365
      %s367 = sphi 0, %s365
      %s368 = sphi 0, %s367
      %s382 = sphi 0, %s368
      %s386 = sphi 0, %s386
      %s388 = sphi 0, %s386
      %s389 = sphi 0, %s388
      %s403 = sphi 0, %s389
      %s407 = sphi 0, %s407
      %s409 = sphi 0, %s407
      %s410 = sphi 0, %s409
      %s424 = sphi 0, %s410
      %s428 = sphi 0, %s428
      %s430 = sphi 0, %s428
      %s431 = sphi 0, %s430
      %s445 = sphi 0, %s431
      %s449 = sphi 0, %s449
      %s451 = sphi 0, %s449
      %s452 = sphi 0, %s451
      %s466 = sphi 0, %s452
      %s474 = sphi 0, %s476
      %s477 = sphi 0, %s474
      %s478 = sphi 0, %s477
      %s494 = sphi 0, %s478
    $region4: #{tpu_custom_call.1} parent=1 // loop_header_branch
      %37 = sbr.rel (%p35) target = $region8
    $region5: #{tpu_custom_call.1} parent=1 // loop_body
      %s39 = ssub.s32 %s34, 1
      %s40 = ssub.s32 %s34, 2
      %s47 = sadd.s32 1, %s42
      %p48 = scmp.ge.s32.totalorder %s47, 1
      %s49 = scalar_select %p48, 0, %s47
      %s50 = sadd.s32 1, %s41
      %s51 = scalar_select %p48, %s50, %s41
      %p52 = scmp.ge.s32.totalorder %s51, 2
      %s53 = scalar_select %p52, 0, %s51
      %s54 = ssub.s32 %s41, %s53
      %p55 = scmp.eq.s32.totalorder %s54, 0
      %s57 = sadd.s32 %s56, 1
      %s58 = scalar_select %p55, %s56, %s57
      %p61 = pneg %p55
      %p62 = scmp.eq.s32.totalorder %s34, 1
      %p63 = por %p61, %p62
      %p64 = scmp.ne.s32.totalorder %s56, %s59
      %p65 = scmp.eq.s32.totalorder %s34, 0
      %p66 = por %p64, %p65
      %p67 = scmp.ne.s32.totalorder %s56, %s59
      %p68 = scmp.eq.s32.totalorder %s39, 1
      %p69 = por %p67, %p68
      %p70 = scmp.ne.s32.totalorder %s59, %s60
      %p71 = scmp.eq.s32.totalorder %s39, 0
      %p72 = por %p70, %p71
      %p73 = scmp.ne.s32.totalorder %s59, %s60
      %p74 = scmp.eq.s32.totalorder %s40, 1
      %p75 = por %p73, %p74
      %p77 = scmp.ne.s32.totalorder %s60, %s76
      %p78 = scmp.eq.s32.totalorder %s40, 0
      %p79 = por %p77, %p78
      %s80 = ssub.s32 %s41, %s53
      %s81 = ssub.s32 %s42, %s49
      %s82 = sor.u32 %s80, %s81
      %p83 = scmp.eq.s32.totalorder %s82, 0
      %s85 = sadd.s32 %s84, 1
      %s86 = scalar_select %p83, %s84, %s85
      %p89 = pneg %p83
      %p90 = scmp.eq.s32.totalorder %s34, 1
      %p91 = por %p89, %p90
      %p92 = scmp.ne.s32.totalorder %s84, %s87
      %p93 = scmp.eq.s32.totalorder %s34, 0
      %p94 = por %p92, %p93
      %p95 = scmp.ne.s32.totalorder %s84, %s87
      %p96 = scmp.eq.s32.totalorder %s39, 1
      %p97 = por %p95, %p96
      %p98 = scmp.ne.s32.totalorder %s87, %s88
      %p99 = scmp.eq.s32.totalorder %s39, 0
      %p100 = por %p98, %p99
      %p101 = scmp.ne.s32.totalorder %s87, %s88
      %p102 = scmp.eq.s32.totalorder %s40, 1
      %p103 = por %p101, %p102
      %p105 = scmp.ne.s32.totalorder %s88, %s104
      %p106 = scmp.eq.s32.totalorder %s40, 0
      %p107 = por %p105, %p106
      %s108 = ssub.s32 %s41, %s53
      %p109 = scmp.eq.s32.totalorder %s108, 0
      %s111 = sadd.s32 %s110, 1
      %s112 = scalar_select %p109, %s110, %s111
      %p115 = pneg %p109
      %p116 = scmp.eq.s32.totalorder %s34, 1
      %p117 = por %p115, %p116
      %p118 = scmp.ne.s32.totalorder %s110, %s113
      %p119 = scmp.eq.s32.totalorder %s34, 0
      %p120 = por %p118, %p119
      %p121 = scmp.ne.s32.totalorder %s110, %s113
      %p122 = scmp.eq.s32.totalorder %s39, 1
      %p123 = por %p121, %p122
      %p124 = scmp.ne.s32.totalorder %s113, %s114
      %p125 = scmp.eq.s32.totalorder %s39, 0
      %p126 = por %p124, %p125
      %p127 = scmp.ne.s32.totalorder %s113, %s114
      %p128 = scmp.eq.s32.totalorder %s40, 1
      %p129 = por %p127, %p128
      %p131 = scmp.ne.s32.totalorder %s114, %s130
      %p132 = scmp.eq.s32.totalorder %s40, 0
      %p133 = por %p131, %p132
      %s135 = sadd.s32 %s134, 1
      %p138 = scmp.eq.s32.totalorder %s34, 1
      %p139 = scmp.ne.s32.totalorder %s134, %s136
      %p140 = scmp.eq.s32.totalorder %s34, 0
      %p141 = por %p139, %p140
      %p142 = scmp.ne.s32.totalorder %s134, %s136
      %p143 = scmp.eq.s32.totalorder %s39, 1
      %p144 = por %p142, %p143
      %p145 = scmp.ne.s32.totalorder %s136, %s137
      %p146 = scmp.eq.s32.totalorder %s39, 0
      %p147 = por %p145, %p146
      %p148 = scmp.ne.s32.totalorder %s136, %s137
      %p149 = scmp.eq.s32.totalorder %s40, 1
      %p150 = por %p148, %p149
      %p152 = scmp.ne.s32.totalorder %s137, %s151
      %p153 = scmp.eq.s32.totalorder %s40, 0
      %p154 = por %p152, %p153
      %s156 = sadd.s32 %s155, 1
      %p159 = scmp.eq.s32.totalorder %s34, 1
      %p160 = scmp.ne.s32.totalorder %s155, %s157
      %p161 = scmp.eq.s32.totalorder %s34, 0
      %p162 = por %p160, %p161
      %p163 = scmp.ne.s32.totalorder %s155, %s157
      %p164 = scmp.eq.s32.totalorder %s39, 1
      %p165 = por %p163, %p164
      %p166 = scmp.ne.s32.totalorder %s157, %s158
      %p167 = scmp.eq.s32.totalorder %s39, 0
      %p168 = por %p166, %p167
      %p169 = scmp.ne.s32.totalorder %s157, %s158
      %p170 = scmp.eq.s32.totalorder %s40, 1
      %p171 = por %p169, %p170
      %p173 = scmp.ne.s32.totalorder %s158, %s172
      %p174 = scmp.eq.s32.totalorder %s40, 0
      %p175 = por %p173, %p174
      %s177 = sadd.s32 %s176, 1
      %p180 = scmp.eq.s32.totalorder %s34, 1
      %p181 = scmp.ne.s32.totalorder %s176, %s178
      %p182 = scmp.eq.s32.totalorder %s34, 0
      %p183 = por %p181, %p182
      %p184 = scmp.ne.s32.totalorder %s176, %s178
      %p185 = scmp.eq.s32.totalorder %s39, 1
      %p186 = por %p184, %p185
      %p187 = scmp.ne.s32.totalorder %s178, %s179
      %p188 = scmp.eq.s32.totalorder %s39, 0
      %p189 = por %p187, %p188
      %p190 = scmp.ne.s32.totalorder %s178, %s179
      %p191 = scmp.eq.s32.totalorder %s40, 1
      %p192 = por %p190, %p191
      %p194 = scmp.ne.s32.totalorder %s179, %s193
      %p195 = scmp.eq.s32.totalorder %s40, 0
      %p196 = por %p194, %p195
      %s198 = sadd.s32 %s197, 1
      %p201 = scmp.eq.s32.totalorder %s34, 1
      %p202 = scmp.ne.s32.totalorder %s197, %s199
      %p203 = scmp.eq.s32.totalorder %s34, 0
      %p204 = por %p202, %p203
      %p205 = scmp.ne.s32.totalorder %s197, %s199
      %p206 = scmp.eq.s32.totalorder %s39, 1
      %p207 = por %p205, %p206
      %p208 = scmp.ne.s32.totalorder %s199, %s200
      %p209 = scmp.eq.s32.totalorder %s39, 0
      %p210 = por %p208, %p209
      %p211 = scmp.ne.s32.totalorder %s199, %s200
      %p212 = scmp.eq.s32.totalorder %s40, 1
      %p213 = por %p211, %p212
      %p215 = scmp.ne.s32.totalorder %s200, %s214
      %p216 = scmp.eq.s32.totalorder %s40, 0
      %p217 = por %p215, %p216
      %s219 = sadd.s32 %s218, 1
      %p222 = scmp.eq.s32.totalorder %s34, 1
      %p223 = scmp.ne.s32.totalorder %s218, %s220
      %p224 = scmp.eq.s32.totalorder %s34, 0
      %p225 = por %p223, %p224
      %p226 = scmp.ne.s32.totalorder %s218, %s220
      %p227 = scmp.eq.s32.totalorder %s39, 1
      %p228 = por %p226, %p227
      %p229 = scmp.ne.s32.totalorder %s220, %s221
      %p230 = scmp.eq.s32.totalorder %s39, 0
      %p231 = por %p229, %p230
      %p232 = scmp.ne.s32.totalorder %s220, %s221
      %p233 = scmp.eq.s32.totalorder %s40, 1
      %p234 = por %p232, %p233
      %p236 = scmp.ne.s32.totalorder %s221, %s235
      %p237 = scmp.eq.s32.totalorder %s40, 0
      %p238 = por %p236, %p237
      %s240 = sadd.s32 %s239, 1
      %p243 = scmp.eq.s32.totalorder %s34, 1
      %p244 = scmp.ne.s32.totalorder %s239, %s241
      %p245 = scmp.eq.s32.totalorder %s34, 0
      %p246 = por %p244, %p245
      %p247 = scmp.ne.s32.totalorder %s239, %s241
      %p248 = scmp.eq.s32.totalorder %s39, 1
      %p249 = por %p247, %p248
      %p250 = scmp.ne.s32.totalorder %s241, %s242
      %p251 = scmp.eq.s32.totalorder %s39, 0
      %p252 = por %p250, %p251
      %p253 = scmp.ne.s32.totalorder %s241, %s242
      %p254 = scmp.eq.s32.totalorder %s40, 1
      %p255 = por %p253, %p254
      %p257 = scmp.ne.s32.totalorder %s242, %s256
      %p258 = scmp.eq.s32.totalorder %s40, 0
      %p259 = por %p257, %p258
      %s261 = sadd.s32 %s260, 1
      %p264 = scmp.eq.s32.totalorder %s34, 1
      %p265 = scmp.ne.s32.totalorder %s260, %s262
      %p266 = scmp.eq.s32.totalorder %s34, 0
      %p267 = por %p265, %p266
      %p268 = scmp.ne.s32.totalorder %s260, %s262
      %p269 = scmp.eq.s32.totalorder %s39, 1
      %p270 = por %p268, %p269
      %p271 = scmp.ne.s32.totalorder %s262, %s263
      %p272 = scmp.eq.s32.totalorder %s39, 0
      %p273 = por %p271, %p272
      %p274 = scmp.ne.s32.totalorder %s262, %s263
      %p275 = scmp.eq.s32.totalorder %s40, 1
      %p276 = por %p274, %p275
      %p278 = scmp.ne.s32.totalorder %s263, %s277
      %p279 = scmp.eq.s32.totalorder %s40, 0
      %p280 = por %p278, %p279
      %s282 = sadd.s32 %s281, 1
      %p285 = scmp.eq.s32.totalorder %s34, 1
      %p286 = scmp.ne.s32.totalorder %s281, %s283
      %p287 = scmp.eq.s32.totalorder %s34, 0
      %p288 = por %p286, %p287
      %p289 = scmp.ne.s32.totalorder %s281, %s283
      %p290 = scmp.eq.s32.totalorder %s39, 1
      %p291 = por %p289, %p290
      %p292 = scmp.ne.s32.totalorder %s283, %s284
      %p293 = scmp.eq.s32.totalorder %s39, 0
      %p294 = por %p292, %p293
      %p295 = scmp.ne.s32.totalorder %s283, %s284
      %p296 = scmp.eq.s32.totalorder %s40, 1
      %p297 = por %p295, %p296
      %p299 = scmp.ne.s32.totalorder %s284, %s298
      %p300 = scmp.eq.s32.totalorder %s40, 0
      %p301 = por %p299, %p300
      %s303 = sadd.s32 %s302, 1
      %p306 = scmp.eq.s32.totalorder %s34, 1
      %p307 = scmp.ne.s32.totalorder %s302, %s304
      %p308 = scmp.eq.s32.totalorder %s34, 0
      %p309 = por %p307, %p308
      %p310 = scmp.ne.s32.totalorder %s302, %s304
      %p311 = scmp.eq.s32.totalorder %s39, 1
      %p312 = por %p310, %p311
      %p313 = scmp.ne.s32.totalorder %s304, %s305
      %p314 = scmp.eq.s32.totalorder %s39, 0
      %p315 = por %p313, %p314
      %p316 = scmp.ne.s32.totalorder %s304, %s305
      %p317 = scmp.eq.s32.totalorder %s40, 1
      %p318 = por %p316, %p317
      %p320 = scmp.ne.s32.totalorder %s305, %s319
      %p321 = scmp.eq.s32.totalorder %s40, 0
      %p322 = por %p320, %p321
      %s324 = sadd.s32 %s323, 1
      %p327 = scmp.eq.s32.totalorder %s34, 1
      %p328 = scmp.ne.s32.totalorder %s323, %s325
      %p329 = scmp.eq.s32.totalorder %s34, 0
      %p330 = por %p328, %p329
      %p331 = scmp.ne.s32.totalorder %s323, %s325
      %p332 = scmp.eq.s32.totalorder %s39, 1
      %p333 = por %p331, %p332
      %p334 = scmp.ne.s32.totalorder %s325, %s326
      %p335 = scmp.eq.s32.totalorder %s39, 0
      %p336 = por %p334, %p335
      %p337 = scmp.ne.s32.totalorder %s325, %s326
      %p338 = scmp.eq.s32.totalorder %s40, 1
      %p339 = por %p337, %p338
      %p341 = scmp.ne.s32.totalorder %s326, %s340
      %p342 = scmp.eq.s32.totalorder %s40, 0
      %p343 = por %p341, %p342
      %s345 = sadd.s32 %s344, 1
      %p348 = scmp.eq.s32.totalorder %s34, 1
      %p349 = scmp.ne.s32.totalorder %s344, %s346
      %p350 = scmp.eq.s32.totalorder %s34, 0
      %p351 = por %p349, %p350
      %p352 = scmp.ne.s32.totalorder %s344, %s346
      %p353 = scmp.eq.s32.totalorder %s39, 1
      %p354 = por %p352, %p353
      %p355 = scmp.ne.s32.totalorder %s346, %s347
      %p356 = scmp.eq.s32.totalorder %s39, 0
      %p357 = por %p355, %p356
      %p358 = scmp.ne.s32.totalorder %s346, %s347
      %p359 = scmp.eq.s32.totalorder %s40, 1
      %p360 = por %p358, %p359
      %p362 = scmp.ne.s32.totalorder %s347, %s361
      %p363 = scmp.eq.s32.totalorder %s40, 0
      %p364 = por %p362, %p363
      %s366 = sadd.s32 %s365, 1
      %p369 = scmp.eq.s32.totalorder %s34, 1
      %p370 = scmp.ne.s32.totalorder %s365, %s367
      %p371 = scmp.eq.s32.totalorder %s34, 0
      %p372 = por %p370, %p371
      %p373 = scmp.ne.s32.totalorder %s365, %s367
      %p374 = scmp.eq.s32.totalorder %s39, 1
      %p375 = por %p373, %p374
      %p376 = scmp.ne.s32.totalorder %s367, %s368
      %p377 = scmp.eq.s32.totalorder %s39, 0
      %p378 = por %p376, %p377
      %p379 = scmp.ne.s32.totalorder %s367, %s368
      %p380 = scmp.eq.s32.totalorder %s40, 1
      %p381 = por %p379, %p380
      %p383 = scmp.ne.s32.totalorder %s368, %s382
      %p384 = scmp.eq.s32.totalorder %s40, 0
      %p385 = por %p383, %p384
      %s387 = sadd.s32 %s386, 1
      %p390 = scmp.eq.s32.totalorder %s34, 1
      %p391 = scmp.ne.s32.totalorder %s386, %s388
      %p392 = scmp.eq.s32.totalorder %s34, 0
      %p393 = por %p391, %p392
      %p394 = scmp.ne.s32.totalorder %s386, %s388
      %p395 = scmp.eq.s32.totalorder %s39, 1
      %p396 = por %p394, %p395
      %p397 = scmp.ne.s32.totalorder %s388, %s389
      %p398 = scmp.eq.s32.totalorder %s39, 0
      %p399 = por %p397, %p398
      %p400 = scmp.ne.s32.totalorder %s388, %s389
      %p401 = scmp.eq.s32.totalorder %s40, 1
      %p402 = por %p400, %p401
      %p404 = scmp.ne.s32.totalorder %s389, %s403
      %p405 = scmp.eq.s32.totalorder %s40, 0
      %p406 = por %p404, %p405
      %s408 = sadd.s32 %s407, 1
      %p411 = scmp.eq.s32.totalorder %s34, 1
      %p412 = scmp.ne.s32.totalorder %s407, %s409
      %p413 = scmp.eq.s32.totalorder %s34, 0
      %p414 = por %p412, %p413
      %p415 = scmp.ne.s32.totalorder %s407, %s409
      %p416 = scmp.eq.s32.totalorder %s39, 1
      %p417 = por %p415, %p416
      %p418 = scmp.ne.s32.totalorder %s409, %s410
      %p419 = scmp.eq.s32.totalorder %s39, 0
      %p420 = por %p418, %p419
      %p421 = scmp.ne.s32.totalorder %s409, %s410
      %p422 = scmp.eq.s32.totalorder %s40, 1
      %p423 = por %p421, %p422
      %p425 = scmp.ne.s32.totalorder %s410, %s424
      %p426 = scmp.eq.s32.totalorder %s40, 0
      %p427 = por %p425, %p426
      %s429 = sadd.s32 %s428, 1
      %p432 = scmp.eq.s32.totalorder %s34, 1
      %p433 = scmp.ne.s32.totalorder %s428, %s430
      %p434 = scmp.eq.s32.totalorder %s34, 0
      %p435 = por %p433, %p434
      %p436 = scmp.ne.s32.totalorder %s428, %s430
      %p437 = scmp.eq.s32.totalorder %s39, 1
      %p438 = por %p436, %p437
      %p439 = scmp.ne.s32.totalorder %s430, %s431
      %p440 = scmp.eq.s32.totalorder %s39, 0
      %p441 = por %p439, %p440
      %p442 = scmp.ne.s32.totalorder %s430, %s431
      %p443 = scmp.eq.s32.totalorder %s40, 1
      %p444 = por %p442, %p443
      %p446 = scmp.ne.s32.totalorder %s431, %s445
      %p447 = scmp.eq.s32.totalorder %s40, 0
      %p448 = por %p446, %p447
      %s450 = sadd.s32 %s449, 1
      %p453 = scmp.eq.s32.totalorder %s34, 1
      %p454 = scmp.ne.s32.totalorder %s449, %s451
      %p455 = scmp.eq.s32.totalorder %s34, 0
      %p456 = por %p454, %p455
      %p457 = scmp.ne.s32.totalorder %s449, %s451
      %p458 = scmp.eq.s32.totalorder %s39, 1
      %p459 = por %p457, %p458
      %p460 = scmp.ne.s32.totalorder %s451, %s452
      %p461 = scmp.eq.s32.totalorder %s39, 0
      %p462 = por %p460, %p461
      %p463 = scmp.ne.s32.totalorder %s451, %s452
      %p464 = scmp.eq.s32.totalorder %s40, 1
      %p465 = por %p463, %p464
      %p467 = scmp.ne.s32.totalorder %s452, %s466
      %p468 = scmp.eq.s32.totalorder %s40, 0
      %p469 = por %p467, %p468
      %s470 = ssub.s32 %s41, %s53
      %s471 = ssub.s32 %s42, %s49
      %s472 = sor.u32 %s470, %s471
      %p473 = scmp.eq.s32.totalorder %s472, 0
      %s475 = sadd.s32 %s474, 1
      %s476 = scalar_select %p473, %s474, %s475
      %p479 = pneg %p473
      %p480 = scmp.eq.s32.totalorder %s34, 1
      %p481 = por %p479, %p480
      %p482 = scmp.ne.s32.totalorder %s474, %s477
      %p483 = scmp.eq.s32.totalorder %s34, 0
      %p484 = por %p482, %p483
      %p485 = scmp.ne.s32.totalorder %s474, %s477
      %p486 = scmp.eq.s32.totalorder %s39, 1
      %p487 = por %p485, %p486
      %p488 = scmp.ne.s32.totalorder %s477, %s478
      %p489 = scmp.eq.s32.totalorder %s39, 0
      %p490 = por %p488, %p489
      %p491 = scmp.ne.s32.totalorder %s477, %s478
      %p492 = scmp.eq.s32.totalorder %s40, 1
      %p493 = por %p491, %p492
      %p495 = scmp.ne.s32.totalorder %s478, %s494
      %p496 = scmp.eq.s32.totalorder %s40, 0
      %p497 = por %p495, %p496
      %p498 = scmp.le.s32.totalorder 1, %s34
      %p499 = scmp.lt.s32.totalorder %s34, 3
      %p500 = pnand %p498, %p499
      %p501 = pneg %p500
      // Predicated region
      $region9: #{tpu_custom_call.1} parent=5 // pred_check
        _
      $region10: #{tpu_custom_call.1} parent=5 // pred_check_branch
        %503 = sbr.rel (%p500) target = $region12
      $region11: #{tpu_custom_call.1} parent=5 // pred_region
        %s504 = ssub.s32 %s34, 1
        // Predicated region
        $region13: #{tpu_custom_call.1} parent=11 // pred_check
          %p505 = pneg %p147
        $region14: #{tpu_custom_call.1} parent=11 // pred_check_branch
          %507 = sbr.rel (%p505) target = $region16
        $region15: #{tpu_custom_call.1} parent=11 // pred_region
          _
        $region16: #{tpu_custom_call.1} parent=11 // pred_fallthru
          _
        // Predicated region
        $region17: #{tpu_custom_call.1} parent=11 // pred_check
          %p508 = pneg %p168
        $region18: #{tpu_custom_call.1} parent=11 // pred_check_branch
          %510 = sbr.rel (%p508) target = $region20
        $region19: #{tpu_custom_call.1} parent=11 // pred_region
          %s512 = ssub.s32 16, 16
          %513 = vsyncadd [#allocation8], %s512
          %s515 = sshll.u32 [#allocation7], 4
          %s516 = int_to_ptr.vmem [resolvable:$true] %s515
          %518 = dma.hbm_to_vmem [thread:$0]  %s4, 16, %s516, [#allocation8]
        $region20: #{tpu_custom_call.1} parent=11 // pred_fallthru
          _
        // Predicated region
        $region21: #{tpu_custom_call.1} parent=11 // pred_check
          %p519 = pneg %p189
        $region22: #{tpu_custom_call.1} parent=11 // pred_check_branch
          %521 = sbr.rel (%p519) target = $region24
        $region23: #{tpu_custom_call.1} parent=11 // pred_region
          _
        $region24: #{tpu_custom_call.1} parent=11 // pred_fallthru
          _
        // Predicated region
        $region25: #{tpu_custom_call.1} parent=11 // pred_check
          %p522 = pneg %p210
        $region26: #{tpu_custom_call.1} parent=11 // pred_check_branch
          %524 = sbr.rel (%p522) target = $region28
        $region27: #{tpu_custom_call.1} parent=11 // pred_region
          %s526 = ssub.s32 16, 16
          %527 = vsyncadd [#allocation8], %s526
          %s529 = sshll.u32 [#allocation9], 4
          %s530 = int_to_ptr.vmem [resolvable:$true] %s529
          %532 = dma.hbm_to_vmem [thread:$0]  %s6, 16, %s530, [#allocation8]
        $region28: #{tpu_custom_call.1} parent=11 // pred_fallthru
          _
        // Predicated region
        $region29: #{tpu_custom_call.1} parent=11 // pred_check
          %p533 = pneg %p231
        $region30: #{tpu_custom_call.1} parent=11 // pred_check_branch
          %535 = sbr.rel (%p533) target = $region32
        $region31: #{tpu_custom_call.1} parent=11 // pred_region
          _
        $region32: #{tpu_custom_call.1} parent=11 // pred_fallthru
          _
        // Predicated region
        $region33: #{tpu_custom_call.1} parent=11 // pred_check
          %p536 = pneg %p252
        $region34: #{tpu_custom_call.1} parent=11 // pred_check_branch
          %538 = sbr.rel (%p536) target = $region36
        $region35: #{tpu_custom_call.1} parent=11 // pred_region
          %s540 = ssub.s32 16, 16
          %541 = vsyncadd [#allocation11], %s540
          %s543 = sshll.u32 [#allocation10], 4
          %s544 = int_to_ptr.vmem [resolvable:$true] %s543
          %546 = dma.hbm_to_vmem [thread:$0]  %s8, 16, %s544, [#allocation11]
        $region36: #{tpu_custom_call.1} parent=11 // pred_fallthru
          _
        // Predicated region
        $region37: #{tpu_custom_call.1} parent=11 // pred_check
          %p547 = pneg %p273
        $region38: #{tpu_custom_call.1} parent=11 // pred_check_branch
          %549 = sbr.rel (%p547) target = $region40
        $region39: #{tpu_custom_call.1} parent=11 // pred_region
          _
        $region40: #{tpu_custom_call.1} parent=11 // pred_fallthru
          _
        // Predicated region
        $region41: #{tpu_custom_call.1} parent=11 // pred_check
          %p550 = pneg %p294
        $region42: #{tpu_custom_call.1} parent=11 // pred_check_branch
          %552 = sbr.rel (%p550) target = $region44
        $region43: #{tpu_custom_call.1} parent=11 // pred_region
          %s554 = ssub.s32 16, 16
          %555 = vsyncadd [#allocation11], %s554
          %s557 = sshll.u32 [#allocation12], 4
          %s558 = int_to_ptr.vmem [resolvable:$true] %s557
          %560 = dma.hbm_to_vmem [thread:$0]  %s10, 16, %s558, [#allocation11]
        $region44: #{tpu_custom_call.1} parent=11 // pred_fallthru
          _
        // Predicated region
        $region45: #{tpu_custom_call.1} parent=11 // pred_check
          %p561 = pneg %p315
        $region46: #{tpu_custom_call.1} parent=11 // pred_check_branch
          %563 = sbr.rel (%p561) target = $region48
        $region47: #{tpu_custom_call.1} parent=11 // pred_region
          _
        $region48: #{tpu_custom_call.1} parent=11 // pred_fallthru
          _
        // Predicated region
        $region49: #{tpu_custom_call.1} parent=11 // pred_check
          %p564 = pneg %p336
        $region50: #{tpu_custom_call.1} parent=11 // pred_check_branch
          %566 = sbr.rel (%p564) target = $region52
        $region51: #{tpu_custom_call.1} parent=11 // pred_region
          %s568 = ssub.s32 16, 16
          %569 = vsyncadd [#allocation14], %s568
          %s571 = sshll.u32 [#allocation13], 4
          %s572 = int_to_ptr.vmem [resolvable:$true] %s571
          %574 = dma.hbm_to_vmem [thread:$0]  %s12, 16, %s572, [#allocation14]
        $region52: #{tpu_custom_call.1} parent=11 // pred_fallthru
          _
        // Predicated region
        $region53: #{tpu_custom_call.1} parent=11 // pred_check
          %p575 = pneg %p357
        $region54: #{tpu_custom_call.1} parent=11 // pred_check_branch
          %577 = sbr.rel (%p575) target = $region56
        $region55: #{tpu_custom_call.1} parent=11 // pred_region
          %s579 = ssub.s32 16, 16
          %580 = vsyncadd [#allocation14], %s579
          %s582 = sshll.u32 [#allocation15], 4
          %s583 = int_to_ptr.vmem [resolvable:$true] %s582
          %585 = dma.hbm_to_vmem [thread:$0]  %s13, 16, %s583, [#allocation14]
        $region56: #{tpu_custom_call.1} parent=11 // pred_fallthru
          _
        // Predicated region
        $region57: #{tpu_custom_call.1} parent=11 // pred_check
          %p586 = pneg %p378
        $region58: #{tpu_custom_call.1} parent=11 // pred_check_branch
          %588 = sbr.rel (%p586) target = $region60
        $region59: #{tpu_custom_call.1} parent=11 // pred_region
          _
        $region60: #{tpu_custom_call.1} parent=11 // pred_fallthru
          _
        // Predicated region
        $region61: #{tpu_custom_call.1} parent=11 // pred_check
          %p589 = pneg %p399
        $region62: #{tpu_custom_call.1} parent=11 // pred_check_branch
          %591 = sbr.rel (%p589) target = $region64
        $region63: #{tpu_custom_call.1} parent=11 // pred_region
          _
        $region64: #{tpu_custom_call.1} parent=11 // pred_fallthru
          _
        // Predicated region
        $region65: #{tpu_custom_call.1} parent=11 // pred_check
          %p592 = pneg %p420
        $region66: #{tpu_custom_call.1} parent=11 // pred_check_branch
          %594 = sbr.rel (%p592) target = $region68
        $region67: #{tpu_custom_call.1} parent=11 // pred_region
          _
        $region68: #{tpu_custom_call.1} parent=11 // pred_fallthru
          _
        // Predicated region
        $region69: #{tpu_custom_call.1} parent=11 // pred_check
          %p595 = pneg %p441
        $region70: #{tpu_custom_call.1} parent=11 // pred_check_branch
          %597 = sbr.rel (%p595) target = $region72
        $region71: #{tpu_custom_call.1} parent=11 // pred_region
          _
        $region72: #{tpu_custom_call.1} parent=11 // pred_fallthru
          _
        // Predicated region
        $region73: #{tpu_custom_call.1} parent=11 // pred_check
          %p598 = pneg %p462
        $region74: #{tpu_custom_call.1} parent=11 // pred_check_branch
          %600 = sbr.rel (%p598) target = $region76
        $region75: #{tpu_custom_call.1} parent=11 // pred_region
          _
        $region76: #{tpu_custom_call.1} parent=11 // pred_fallthru
          _
      $region12: #{tpu_custom_call.1} parent=5 // pred_fallthru
        _
      %p601 = scmp.lt.s32.totalorder %s34, 2
      // Predicated region
      $region77: #{tpu_custom_call.1} parent=5 // pred_check
        %p602 = pneg %p601
      $region78: #{tpu_custom_call.1} parent=5 // pred_check_branch
        %604 = sbr.rel (%p602) target = $region80
      $region79: #{tpu_custom_call.1} parent=5 // pred_region
        // Predicated region
        $region81: #{tpu_custom_call.1} parent=79 // pred_check
          %p605 = pneg %p66
        $region82: #{tpu_custom_call.1} parent=79 // pred_check_branch
          %607 = sbr.rel (%p605) target = $region84
        $region83: #{tpu_custom_call.1} parent=79 // pred_region
          %p608 = scmp.lt.s32.totalorder %s41, 1
          %s609 = scalar_select %p608, %s41, 1
          %s610 = smul.addr %s609, 8
          %s611 = scalar_lea.vmem %s0, %s610
        $region84: #{tpu_custom_call.1} parent=79 // pred_fallthru
          _
        // Predicated region
        $region85: #{tpu_custom_call.1} parent=79 // pred_check
          %p612 = pneg %p94
        $region86: #{tpu_custom_call.1} parent=79 // pred_check_branch
          %614 = sbr.rel (%p612) target = $region88
        $region87: #{tpu_custom_call.1} parent=79 // pred_region
          %p615 = scmp.lt.s32.totalorder %s41, 1
          %s616 = scalar_select %p615, %s41, 1
          %p617 = scmp.lt.s32.totalorder %s42, 0
          %s618 = scalar_select %p617, %s42, 0
          %s619 = sadd.s32 %s618, %s616
          %s620 = smul.addr %s619, 8
          %s621 = scalar_lea.vmem %s1, %s620
        $region88: #{tpu_custom_call.1} parent=79 // pred_fallthru
          _
        // Predicated region
        $region89: #{tpu_custom_call.1} parent=79 // pred_check
          %p622 = pneg %p120
        $region90: #{tpu_custom_call.1} parent=79 // pred_check_branch
          %624 = sbr.rel (%p622) target = $region92
        $region91: #{tpu_custom_call.1} parent=79 // pred_region
          %s625 = sand.u32 %s110, 1
          %s626 = scalar_lea.sflag [#allocation5], %s625
          %s627 = sand.u32 %s110, 1
          %s628 = scalar_lea.vmem [#allocation4], %s627
          %s630 = ssub.s32 16, 16
          %631 = vsyncadd %s626, %s630
          %s632 = smul.addr %s41, 16
          %s633 = scalar_lea.hbm %s2, %s632
          %s635 = sshll.u32 %s628, 4
          %s636 = int_to_ptr.vmem [resolvable:$true] %s635
          %638 = dma.hbm_to_vmem [thread:$0]  %s633, 16, %s636, %s626
        $region92: #{tpu_custom_call.1} parent=79 // pred_fallthru
          _
      $region80: #{tpu_custom_call.1} parent=5 // pred_fallthru
        _
      %p639 = scmp.le.s32.totalorder 1, %s34
      %p640 = scmp.lt.s32.totalorder %s34, 3
      %p641 = pnand %p639, %p640
      %p642 = pneg %p641
      // Predicated region
      $region93: #{tpu_custom_call.1} parent=5 // pred_check
        _
      $region94: #{tpu_custom_call.1} parent=5 // pred_check_branch
        %644 = sbr.rel (%p641) target = $region96
      $region95: #{tpu_custom_call.1} parent=5 // pred_region
        %s645 = ssub.s32 %s34, 1
        %s646 = sand.u32 %s113, 1
        %s647 = scalar_lea.sflag [#allocation5], %s646
        %s648 = sand.u32 %s113, 1
        %s649 = scalar_lea.vmem [#allocation4], %s648
        // Predicated region
        $region97: #{tpu_custom_call.1} parent=95 // pred_check
          %p650 = pneg %p126
        $region98: #{tpu_custom_call.1} parent=95 // pred_check_branch
          %652 = sbr.rel (%p650) target = $region100
        $region99: #{tpu_custom_call.1} parent=95 // pred_region
          %653 = dma.done %s647, 16
        $region100: #{tpu_custom_call.1} parent=95 // pred_fallthru
          _
        // Predicated region
        $region101: #{tpu_custom_call.1} parent=95 // pred_check
          %p654 = pneg %p168
        $region102: #{tpu_custom_call.1} parent=95 // pred_check_branch
          %656 = sbr.rel (%p654) target = $region104
        $region103: #{tpu_custom_call.1} parent=95 // pred_region
          %657 = dma.done [#allocation8], 16
        $region104: #{tpu_custom_call.1} parent=95 // pred_fallthru
          _
        // Predicated region
        $region105: #{tpu_custom_call.1} parent=95 // pred_check
          %p658 = pneg %p210
        $region106: #{tpu_custom_call.1} parent=95 // pred_check_branch
          %660 = sbr.rel (%p658) target = $region108
        $region107: #{tpu_custom_call.1} parent=95 // pred_region
          %661 = dma.done [#allocation8], 16
        $region108: #{tpu_custom_call.1} parent=95 // pred_fallthru
          _
        // Predicated region
        $region109: #{tpu_custom_call.1} parent=95 // pred_check
          %p662 = pneg %p252
        $region110: #{tpu_custom_call.1} parent=95 // pred_check_branch
          %664 = sbr.rel (%p662) target = $region112
        $region111: #{tpu_custom_call.1} parent=95 // pred_region
          %665 = dma.done [#allocation11], 16
        $region112: #{tpu_custom_call.1} parent=95 // pred_fallthru
          _
        // Predicated region
        $region113: #{tpu_custom_call.1} parent=95 // pred_check
          %p666 = pneg %p294
        $region114: #{tpu_custom_call.1} parent=95 // pred_check_branch
          %668 = sbr.rel (%p666) target = $region116
        $region115: #{tpu_custom_call.1} parent=95 // pred_region
          %669 = dma.done [#allocation11], 16
        $region116: #{tpu_custom_call.1} parent=95 // pred_fallthru
          _
        // Predicated region
        $region117: #{tpu_custom_call.1} parent=95 // pred_check
          %p670 = pneg %p336
        $region118: #{tpu_custom_call.1} parent=95 // pred_check_branch
          %672 = sbr.rel (%p670) target = $region120
        $region119: #{tpu_custom_call.1} parent=95 // pred_region
          %673 = dma.done [#allocation14], 16
        $region120: #{tpu_custom_call.1} parent=95 // pred_fallthru
          _
        // Predicated region
        $region121: #{tpu_custom_call.1} parent=95 // pred_check
          %p674 = pneg %p357
        $region122: #{tpu_custom_call.1} parent=95 // pred_check_branch
          %676 = sbr.rel (%p674) target = $region124
        $region123: #{tpu_custom_call.1} parent=95 // pred_region
          %677 = dma.done [#allocation14], 16
        $region124: #{tpu_custom_call.1} parent=95 // pred_fallthru
          _
        %p678 = scmp.lt.s32.totalorder %s43, 1
        %s679 = scalar_select %p678, %s43, 1
        %s680 = smul.addr %s679, 8
        %s681 = scalar_lea.vmem %s0, %s680
        %p682 = pneg %p72
        %p683 = pneg %p69
        %p684 = scmp.lt.s32.totalorder %s43, 1
        %s685 = scalar_select %p684, %s43, 1
        %p686 = scmp.lt.s32.totalorder %s44, 0
        %s687 = scalar_select %p686, %s44, 0
        %s688 = sadd.s32 %s687, %s685
        %s689 = smul.addr %s688, 8
        %s690 = scalar_lea.vmem %s1, %s689
        %p691 = pneg %p100
        %p692 = pneg %p97
        %s693 = sand.u32 %s113, 1
        %s694 = scalar_lea.sflag [#allocation5], %s693
        %s695 = sand.u32 %s113, 1
        %s696 = scalar_lea.vmem [#allocation4], %s695
        %p697 = pneg %p126
        %p698 = pneg %p123
        %p699 = pneg %p147
        %p700 = pneg %p144
        %p701 = pneg %p168
        %p702 = pneg %p165
        %p703 = pneg %p189
        %p704 = pneg %p186
        %p705 = pneg %p210
        %p706 = pneg %p207
        %p707 = pneg %p231
        %p708 = pneg %p228
        %p709 = pneg %p252
        %p710 = pneg %p249
        %p711 = pneg %p273
        %p712 = pneg %p270
        %p713 = pneg %p294
        %p714 = pneg %p291
        %p715 = pneg %p315
        %p716 = pneg %p312
        %p717 = pneg %p336
        %p718 = pneg %p333
        %p719 = pneg %p357
        %p720 = pneg %p354
        %p721 = pneg %p378
        %p722 = pneg %p375
        %p723 = pneg %p399
        %p724 = pneg %p396
        %p725 = pneg %p420
        %p726 = pneg %p417
        %p727 = pneg %p441
        %p728 = pneg %p438
        %p729 = pneg %p462
        %p730 = pneg %p459
        %p731 = pneg %p490
        %p732 = pneg %p487
        %s733 = sand.u32 %s477, 1
        %s734 = scalar_lea.sflag [#allocation6], %s733
        %s735 = sand.u32 %s477, 1
        %s736 = smul.addr %s735, 8
        %s737 = scalar_lea.vmem [#allocation16], %s736
        %p738 = scmp.lt.s32.totalorder %s43, 1
        %s739 = scalar_select %p738, %s43, 1
        %s740 = smul.addr %s739, 8
        %s741 = scalar_lea.vmem %s0, %s740
        %p742 = scmp.lt.s32.totalorder %s43, 1
        %s743 = scalar_select %p742, %s43, 1
        %p744 = scmp.lt.s32.totalorder %s44, 0
        %s745 = scalar_select %p744, %s44, 0
        %s746 = sadd.s32 %s745, %s743
        %s747 = smul.addr %s746, 8
        %s748 = scalar_lea.vmem %s1, %s747
        %p750 = scmp.eq.s32.totalorder %s44, 0
        // Predicated region
        $region125: #{tpu_custom_call.1} parent=95 // pred_check
          %p751 = pneg %p750
        $region126: #{tpu_custom_call.1} parent=95 // pred_check_branch
          %753 = sbr.rel (%p751) target = $region128
        $region127: #{tpu_custom_call.1} parent=95 // pred_region
          %v754 = vld [vmem:[%s741] sm:$0xff]
          %v755 = vld [vmem:[%s3] sm:$0x1]
          %v756 = vld [vmem:[#allocation7] sm:$0x1]
          %vm757 = vcmask 261120
          %v758 = vsel %vm757, %v754, 0.0
          %759 = vadd.xlane.f32.xlu0 %v758
          %v760 = vpop.xlane.xlu0 %759
          %v761 = vrcp.pop 32.0
          %v762 = vmul.f32 %v760, %v761
          %v763 = vsub.f32 %v754, %v762
          %v764 = vmul.f32 %v763, %v763
          %v765 = vsel %vm757, %v764, 0.0
          %766 = vadd.xlane.f32.xlu0 %v765
          %v767 = vpop.xlane.xlu0 %766
          %v768 = vmul.f32 %v767, %v761
          %v769 = vadd.f32 %v768, 1e-05
          %v770 = vrsqrt.pop %v769
          %v771 = vmul.f32 %v763, %v770
          %v773 = vlaneseq
          %v774 = vshrl.u32 %v773, 7
          %v775 = vsub.s32 0, %v774
          %v776 = vrot.slane %v755, %v775
          %v778 = vmul.f32 %v771, %v776
          %v780 = vlaneseq
          %v781 = vshrl.u32 %v780, 7
          %v782 = vsub.s32 0, %v781
          %v783 = vrot.slane %v756, %v782
          %v785 = vadd.f32 %v778, %v783
          %v786 = vpack.c.bf16 %v785, %v785
          %v787 = vld [vmem:[%s7] sm:$0xf]
          %v788 = vld [vmem:[%s7 + $0x4] sm:$0xf]
          %v789 = vld [vmem:[%s7 + $0x8] sm:$0xf]
          %v790 = vld [vmem:[%s7 + $0xc] sm:$0xf]
          %v791 = vld [vmem:[#allocation10] sm:$0x1]
          %v793 = vlaneseq
          %v794 = vshrl.u32 %v793, 7
          %v795 = vsub.s32 0, %v794
          %v796 = vrot.slane %v791, %v795
          %v802 = vunpack.c.l.b16 %v787
          %v803 = vunpack.c.l.b16 %v788
          %v804 = vunpack.c.l.b16 %v789
          %v805 = vunpack.c.l.b16 %v790
          %v806 = vpack.c.b16 %v803, %v802
          %v807 = vpack.c.b16 %v805, %v804
          %v811 = vsel %vm757, %v786, 0
          %813 = vmatprep.subr.bf16.mxu0 0
          %814 = vmatpush1.bf16.msra.mxu0 %v806
          %815 = vmatprep.subr.bf16.mxu0 0
          %816 = vmatpush1.bf16.msra.mxu0 %v807
          %817 = vmatprep.subr.bf16.mxu0 0
          %818 = vmatpush1.bf16.msra.mxu0 0
          %819 = vmatprep.subr.bf16.mxu0 0
          %820 = vmatpush1.bf16.msra.mxu0 0
          %821 = vmatprep.subr.bf16.mxu0 0
          %822 = vmatpush1.bf16.msra.mxu0 0
          %823 = vmatprep.subr.bf16.mxu0 0
          %824 = vmatpush1.bf16.msra.mxu0 0
          %825 = vmatprep.subr.bf16.mxu0 0
          %826 = vmatpush1.bf16.msra.mxu0 0
          %827 = vmatprep.subr.bf16.mxu0 0
          %828 = vmatpush1.bf16.msra.mxu0 0
          %829 = vmatprep.subr.bf16.mxu0 0
          %830 = vmatpush1.bf16.msra.mxu0 0
          %831 = vmatprep.subr.bf16.mxu0 0
          %832 = vmatpush1.bf16.msra.mxu0 0
          %833 = vmatprep.subr.bf16.mxu0 0
          %834 = vmatpush1.bf16.msra.mxu0 0
          %835 = vmatprep.subr.bf16.mxu0 0
          %836 = vmatpush1.bf16.msra.mxu0 0
          %837 = vmatprep.subr.bf16.mxu0 0
          %838 = vmatpush1.bf16.msra.mxu0 0
          %839 = vmatprep.subr.bf16.mxu0 0
          %840 = vmatpush1.bf16.msra.mxu0 0
          %841 = vmatprep.subr.bf16.mxu0 0
          %842 = vmatpush1.bf16.msra.mxu0 0
          %843 = vmatprep.subr.bf16.mxu0 0
          %844 = vmatpush1.bf16.msra.mxu0 0
          %845 = vmatprep.mubr.bf16.mxu0 0
          %846 = vmatmul.mubr.bf16.gmra.mrb[0].mxu0 %v811
          %v847 = vpop.f32.mrb[0].mxu0
          %v848 = vadd.f32 %v796, %v847
          %v849 = vpop.f32.mrb[0].mxu0
          %v850 = vpop.f32.mrb[0].mxu0
          %v851 = vpop.f32.mrb[0].mxu0
          %852 = vdwg.mxu0
          %v853 = vld [vmem:[%s9] sm:$0xf]
          %v854 = vld [vmem:[%s9 + $0x4] sm:$0xf]
          %v855 = vld [vmem:[%s9 + $0x8] sm:$0xf]
          %v856 = vld [vmem:[%s9 + $0xc] sm:$0xf]
          %v857 = vld [vmem:[#allocation12] sm:$0x1]
          %v859 = vlaneseq
          %v860 = vshrl.u32 %v859, 7
          %v861 = vsub.s32 0, %v860
          %v862 = vrot.slane %v857, %v861
          %v868 = vunpack.c.l.b16 %v853
          %v869 = vunpack.c.l.b16 %v854
          %v870 = vunpack.c.l.b16 %v855
          %v871 = vunpack.c.l.b16 %v856
          %v872 = vpack.c.b16 %v869, %v868
          %v873 = vpack.c.b16 %v871, %v870
          %876 = vmatprep.subr.bf16.mxu0 0
          %877 = vmatpush1.bf16.msra.mxu0 %v872
          %878 = vmatprep.subr.bf16.mxu0 0
          %879 = vmatpush1.bf16.msra.mxu0 %v873
          %880 = vmatprep.subr.bf16.mxu0 0
          %881 = vmatpush1.bf16.msra.mxu0 0
          %882 = vmatprep.subr.bf16.mxu0 0
          %883 = vmatpush1.bf16.msra.mxu0 0
          %884 = vmatprep.subr.bf16.mxu0 0
          %885 = vmatpush1.bf16.msra.mxu0 0
          %886 = vmatprep.subr.bf16.mxu0 0
          %887 = vmatpush1.bf16.msra.mxu0 0
          %888 = vmatprep.subr.bf16.mxu0 0
          %889 = vmatpush1.bf16.msra.mxu0 0
          %890 = vmatprep.subr.bf16.mxu0 0
          %891 = vmatpush1.bf16.msra.mxu0 0
          %892 = vmatprep.subr.bf16.mxu0 0
          %893 = vmatpush1.bf16.msra.mxu0 0
          %894 = vmatprep.subr.bf16.mxu0 0
          %895 = vmatpush1.bf16.msra.mxu0 0
          %896 = vmatprep.subr.bf16.mxu0 0
          %897 = vmatpush1.bf16.msra.mxu0 0
          %898 = vmatprep.subr.bf16.mxu0 0
          %899 = vmatpush1.bf16.msra.mxu0 0
          %900 = vmatprep.subr.bf16.mxu0 0
          %901 = vmatpush1.bf16.msra.mxu0 0
          %902 = vmatprep.subr.bf16.mxu0 0
          %903 = vmatpush1.bf16.msra.mxu0 0
          %904 = vmatprep.subr.bf16.mxu0 0
          %905 = vmatpush1.bf16.msra.mxu0 0
          %906 = vmatprep.subr.bf16.mxu0 0
          %907 = vmatpush1.bf16.msra.mxu0 0
          %908 = vmatprep.mubr.bf16.mxu0 0
          %909 = vmatmul.mubr.bf16.gmra.mrb[0].mxu0 %v811
          %v910 = vpop.f32.mrb[0].mxu0
          %v911 = vadd.f32 %v862, %v910
          %v912 = vpop.f32.mrb[0].mxu0
          %v913 = vpop.f32.mrb[0].mxu0
          %v914 = vpop.f32.mrb[0].mxu0
          %915 = vdwg.mxu0
          %v916 = vpack.c.bf16 %v848, %v848
          %vm917 = vcmask 257024
          %918 = vst.msk [vmem:[#allocation2] sm:$0xf] %vm917, %v916
          %v919 = vpack.c.bf16 %v911, %v911
          %920 = vst.msk [vmem:[#allocation3] sm:$0xf] %vm917, %v919
        $region128: #{tpu_custom_call.1} parent=95 // pred_fallthru
          _
        %v921 = vld [vmem:[%s748] sm:$0xff]
        %v922 = vld [vmem:[%s3] sm:$0x1]
        %v923 = vld [vmem:[#allocation7] sm:$0x1]
        %vm924 = vcmask 261120
        %v925 = vsel %vm924, %v921, 0.0
        %926 = vadd.xlane.f32.xlu0 %v925
        %v927 = vpop.xlane.xlu0 %926
        %v928 = vrcp.pop 32.0
        %v929 = vmul.f32 %v927, %v928
        %v930 = vsub.f32 %v921, %v929
        %v931 = vmul.f32 %v930, %v930
        %v932 = vsel %vm924, %v931, 0.0
        %933 = vadd.xlane.f32.xlu0 %v932
        %v934 = vpop.xlane.xlu0 %933
        %v935 = vmul.f32 %v934, %v928
        %v936 = vadd.f32 %v935, 1e-05
        %v937 = vrsqrt.pop %v936
        %v938 = vmul.f32 %v930, %v937
        %v940 = vlaneseq
        %v941 = vshrl.u32 %v940, 7
        %v942 = vsub.s32 0, %v941
        %v943 = vrot.slane %v922, %v942
        %v945 = vmul.f32 %v938, %v943
        %v947 = vlaneseq
        %v948 = vshrl.u32 %v947, 7
        %v949 = vsub.s32 0, %v948
        %v950 = vrot.slane %v923, %v949
        %v952 = vadd.f32 %v945, %v950
        %v953 = vpack.c.bf16 %v952, %v952
        %v954 = vld [vmem:[%s5] sm:$0xf]
        %v955 = vld [vmem:[%s5 + $0x4] sm:$0xf]
        %v956 = vld [vmem:[%s5 + $0x8] sm:$0xf]
        %v957 = vld [vmem:[%s5 + $0xc] sm:$0xf]
        %v958 = vld [vmem:[#allocation9] sm:$0x1]
        %v960 = vlaneseq
        %v961 = vshrl.u32 %v960, 7
        %v962 = vsub.s32 0, %v961
        %v963 = vrot.slane %v958, %v962
        %v969 = vunpack.c.l.b16 %v954
        %v970 = vunpack.c.l.b16 %v955
        %v971 = vunpack.c.l.b16 %v956
        %v972 = vunpack.c.l.b16 %v957
        %v973 = vpack.c.b16 %v970, %v969
        %v974 = vpack.c.b16 %v972, %v971
        %v978 = vsel %vm924, %v953, 0
        %980 = vmatprep.subr.bf16.mxu0 0
        %981 = vmatpush1.bf16.msra.mxu0 %v973
        %982 = vmatprep.subr.bf16.mxu0 0
        %983 = vmatpush1.bf16.msra.mxu0 %v974
        %984 = vmatprep.subr.bf16.mxu0 0
        %985 = vmatpush1.bf16.msra.mxu0 0
        %986 = vmatprep.subr.bf16.mxu0 0
        %987 = vmatpush1.bf16.msra.mxu0 0
        %988 = vmatprep.subr.bf16.mxu0 0
        %989 = vmatpush1.bf16.msra.mxu0 0
        %990 = vmatprep.subr.bf16.mxu0 0
        %991 = vmatpush1.bf16.msra.mxu0 0
        %992 = vmatprep.subr.bf16.mxu0 0
        %993 = vmatpush1.bf16.msra.mxu0 0
        %994 = vmatprep.subr.bf16.mxu0 0
        %995 = vmatpush1.bf16.msra.mxu0 0
        %996 = vmatprep.subr.bf16.mxu0 0
        %997 = vmatpush1.bf16.msra.mxu0 0
        %998 = vmatprep.subr.bf16.mxu0 0
        %999 = vmatpush1.bf16.msra.mxu0 0
        %1000 = vmatprep.subr.bf16.mxu0 0
        %1001 = vmatpush1.bf16.msra.mxu0 0
        %1002 = vmatprep.subr.bf16.mxu0 0
        %1003 = vmatpush1.bf16.msra.mxu0 0
        %1004 = vmatprep.subr.bf16.mxu0 0
        %1005 = vmatpush1.bf16.msra.mxu0 0
        %1006 = vmatprep.subr.bf16.mxu0 0
        %1007 = vmatpush1.bf16.msra.mxu0 0
        %1008 = vmatprep.subr.bf16.mxu0 0
        %1009 = vmatpush1.bf16.msra.mxu0 0
        %1010 = vmatprep.subr.bf16.mxu0 0
        %1011 = vmatpush1.bf16.msra.mxu0 0
        %1012 = vmatprep.mubr.bf16.mxu0 0
        %1013 = vmatmul.mubr.bf16.gmra.mrb[0].mxu0 %v978
        %v1014 = vpop.f32.mrb[0].mxu0
        %v1015 = vadd.f32 %v963, %v1014
        %v1016 = vpop.f32.mrb[0].mxu0
        %v1017 = vpop.f32.mrb[0].mxu0
        %v1018 = vpop.f32.mrb[0].mxu0
        %1019 = vdwg.mxu0
        %v1020 = vpack.c.bf16 %v1015, %v1015
        %1022 = vrot.lane.b32.xlu0 %v1020, 120
        %v1023 = vpop.permute.xlu0 %1022
        %1024 = vrot.lane.b32.xlu0 %v1020, 112
        %v1025 = vpop.permute.xlu0 %1024
        %1026 = vrot.lane.b32.xlu0 %v1020, 104
        %v1027 = vpop.permute.xlu0 %1026
        %v1028 = vld [vmem:[#allocation2] sm:$0xf]
        %1030 = vrot.lane.b32.xlu0 %v1028, 120
        %v1031 = vpop.permute.xlu0 %1030
        %1033 = vrot.lane.b32.xlu0 %v1028, 112
        %v1034 = vpop.permute.xlu0 %1033
        %1036 = vrot.lane.b32.xlu0 %v1028, 104
        %v1037 = vpop.permute.xlu0 %1036
        %v1039 = vld [vmem:[#allocation3] sm:$0xf]
        %1041 = vrot.lane.b32.xlu0 %v1039, 120
        %v1042 = vpop.permute.xlu0 %1041
        %1043 = vrot.lane.b32.xlu0 %v1039, 112
        %v1044 = vpop.permute.xlu0 %1043
        %1045 = vrot.lane.b32.xlu0 %v1039, 104
        %v1046 = vpop.permute.xlu0 %1045
        %v1047 = vld [vmem:[%s649] sm:$0x1]
        %v1049 = vlaneseq
        %v1050 = vshrl.u32 %v1049, 7
        %v1051 = vsub.s32 0, %v1050
        %v1052 = vrot.slane %v1047, %v1051
        %1054 = vxpose.xlu0.c.b16.start [1/8] %v1028, 128
        %1055 = vxpose.xlu0.c.b16.cont [2/8] 0, 128
        %1056 = vxpose.xlu0.c.b16.cont [3/8] 0, 128
        %1057 = vxpose.xlu0.c.b16.cont [4/8] 0, 128
        %1058 = vxpose.xlu0.c.b16.cont [5/8] 0, 128
        %1059 = vxpose.xlu0.c.b16.cont [6/8] 0, 128
        %1060 = vxpose.xlu0.c.b16.cont [7/8] 0, 128
        %1061 = vxpose.xlu0.c.b16.end [8/8] 0, 128
        %v1062 = vpop.trf.xlu0
        %v1063 = vpop.trf.xlu0
        %v1064 = vpop.trf.xlu0
        %v1065 = vpop.trf.xlu0
        %v1066 = vpop.trf.xlu0
        %v1067 = vpop.trf.xlu0
        %v1068 = vpop.trf.xlu0
        %v1069 = vpop.trf.xlu0
        %1070 = vxpose.xlu0.c.b16.start [1/8] %v1031, 128
        %1071 = vxpose.xlu0.c.b16.cont [2/8] 0, 128
        %1072 = vxpose.xlu0.c.b16.cont [3/8] 0, 128
        %1073 = vxpose.xlu0.c.b16.cont [4/8] 0, 128
        %1074 = vxpose.xlu0.c.b16.cont [5/8] 0, 128
        %1075 = vxpose.xlu0.c.b16.cont [6/8] 0, 128
        %1076 = vxpose.xlu0.c.b16.cont [7/8] 0, 128
        %1077 = vxpose.xlu0.c.b16.end [8/8] 0, 128
        %v1078 = vpop.trf.xlu0
        %v1079 = vpop.trf.xlu0
        %v1080 = vpop.trf.xlu0
        %v1081 = vpop.trf.xlu0
        %v1082 = vpop.trf.xlu0
        %v1083 = vpop.trf.xlu0
        %v1084 = vpop.trf.xlu0
        %v1085 = vpop.trf.xlu0
        %1086 = vxpose.xlu0.c.b16.start [1/8] %v1034, 128
        %1087 = vxpose.xlu0.c.b16.cont [2/8] 0, 128
        %1088 = vxpose.xlu0.c.b16.cont [3/8] 0, 128
        %1089 = vxpose.xlu0.c.b16.cont [4/8] 0, 128
        %1090 = vxpose.xlu0.c.b16.cont [5/8] 0, 128
        %1091 = vxpose.xlu0.c.b16.cont [6/8] 0, 128
        %1092 = vxpose.xlu0.c.b16.cont [7/8] 0, 128
        %1093 = vxpose.xlu0.c.b16.end [8/8] 0, 128
        %v1094 = vpop.trf.xlu0
        %v1095 = vpop.trf.xlu0
        %v1096 = vpop.trf.xlu0
        %v1097 = vpop.trf.xlu0
        %v1098 = vpop.trf.xlu0
        %v1099 = vpop.trf.xlu0
        %v1100 = vpop.trf.xlu0
        %v1101 = vpop.trf.xlu0
        %1102 = vxpose.xlu0.c.b16.start [1/8] %v1037, 128
        %1103 = vxpose.xlu0.c.b16.cont [2/8] 0, 128
        %1104 = vxpose.xlu0.c.b16.cont [3/8] 0, 128
        %1105 = vxpose.xlu0.c.b16.cont [4/8] 0, 128
        %1106 = vxpose.xlu0.c.b16.cont [5/8] 0, 128
        %1107 = vxpose.xlu0.c.b16.cont [6/8] 0, 128
        %1108 = vxpose.xlu0.c.b16.cont [7/8] 0, 128
        %1109 = vxpose.xlu0.c.b16.end [8/8] 0, 128
        %v1110 = vpop.trf.xlu0
        %v1111 = vpop.trf.xlu0
        %v1112 = vpop.trf.xlu0
        %v1113 = vpop.trf.xlu0
        %v1114 = vpop.trf.xlu0
        %v1115 = vpop.trf.xlu0
        %v1116 = vpop.trf.xlu0
        %v1117 = vpop.trf.xlu0
        %vm1118 = vcmask 64512
        %v1120 = vsel %vm1118, %v1020, 0
        %vm1122 = vcmask 1043456
        %v1124 = vsel %vm1122, %v1062, 0
        %1126 = vmatprep.subr.bf16.mxu0 0
        %1127 = vmatpush1.bf16.msra.mxu0 %v1124
        %1128 = vmatprep.subr.bf16.mxu0 0
        %1129 = vmatpush1.bf16.msra.mxu0 0
        %1130 = vmatprep.subr.bf16.mxu0 0
        %1131 = vmatpush1.bf16.msra.mxu0 0
        %1132 = vmatprep.subr.bf16.mxu0 0
        %1133 = vmatpush1.bf16.msra.mxu0 0
        %1134 = vmatprep.subr.bf16.mxu0 0
        %1135 = vmatpush1.bf16.msra.mxu0 0
        %1136 = vmatprep.subr.bf16.mxu0 0
        %1137 = vmatpush1.bf16.msra.mxu0 0
        %1138 = vmatprep.subr.bf16.mxu0 0
        %1139 = vmatpush1.bf16.msra.mxu0 0
        %1140 = vmatprep.subr.bf16.mxu0 0
        %1141 = vmatpush1.bf16.msra.mxu0 0
        %1142 = vmatprep.subr.bf16.mxu0 0
        %1143 = vmatpush1.bf16.msra.mxu0 0
        %1144 = vmatprep.subr.bf16.mxu0 0
        %1145 = vmatpush1.bf16.msra.mxu0 0
        %1146 = vmatprep.subr.bf16.mxu0 0
        %1147 = vmatpush1.bf16.msra.mxu0 0
        %1148 = vmatprep.subr.bf16.mxu0 0
        %1149 = vmatpush1.bf16.msra.mxu0 0
        %1150 = vmatprep.subr.bf16.mxu0 0
        %1151 = vmatpush1.bf16.msra.mxu0 0
        %1152 = vmatprep.subr.bf16.mxu0 0
        %1153 = vmatpush1.bf16.msra.mxu0 0
        %1154 = vmatprep.subr.bf16.mxu0 0
        %1155 = vmatpush1.bf16.msra.mxu0 0
        %1156 = vmatprep.subr.bf16.mxu0 0
        %1157 = vmatpush1.bf16.msra.mxu0 0
        %1158 = vmatprep.mubr.bf16.mxu0 0
        %1159 = vmatmul.mubr.bf16.gmra.mrb[0].mxu0 %v1120
        %v1160 = vpop.f32.mrb[0].mxu0
        %v1161 = vadd.f32 %v1052, %v1160
        %v1162 = vpop.f32.mrb[0].mxu0
        %v1163 = vpop.f32.mrb[0].mxu0
        %v1164 = vpop.f32.mrb[0].mxu0
        %1165 = vdwg.mxu0
        %v1167 = vsel %vm1118, %v1023, 0
        %v1170 = vsel %vm1122, %v1078, 0
        %1172 = vmatprep.subr.bf16.mxu0 0
        %1173 = vmatpush1.bf16.msra.mxu0 %v1170
        %1174 = vmatprep.subr.bf16.mxu0 0
        %1175 = vmatpush1.bf16.msra.mxu0 0
        %1176 = vmatprep.subr.bf16.mxu0 0
        %1177 = vmatpush1.bf16.msra.mxu0 0
        %1178 = vmatprep.subr.bf16.mxu0 0
        %1179 = vmatpush1.bf16.msra.mxu0 0
        %1180 = vmatprep.subr.bf16.mxu0 0
        %1181 = vmatpush1.bf16.msra.mxu0 0
        %1182 = vmatprep.subr.bf16.mxu0 0
        %1183 = vmatpush1.bf16.msra.mxu0 0
        %1184 = vmatprep.subr.bf16.mxu0 0
        %1185 = vmatpush1.bf16.msra.mxu0 0
        %1186 = vmatprep.subr.bf16.mxu0 0
        %1187 = vmatpush1.bf16.msra.mxu0 0
        %1188 = vmatprep.subr.bf16.mxu0 0
        %1189 = vmatpush1.bf16.msra.mxu0 0
        %1190 = vmatprep.subr.bf16.mxu0 0
        %1191 = vmatpush1.bf16.msra.mxu0 0
        %1192 = vmatprep.subr.bf16.mxu0 0
        %1193 = vmatpush1.bf16.msra.mxu0 0
        %1194 = vmatprep.subr.bf16.mxu0 0
        %1195 = vmatpush1.bf16.msra.mxu0 0
        %1196 = vmatprep.subr.bf16.mxu0 0
        %1197 = vmatpush1.bf16.msra.mxu0 0
        %1198 = vmatprep.subr.bf16.mxu0 0
        %1199 = vmatpush1.bf16.msra.mxu0 0
        %1200 = vmatprep.subr.bf16.mxu0 0
        %1201 = vmatpush1.bf16.msra.mxu0 0
        %1202 = vmatprep.subr.bf16.mxu0 0
        %1203 = vmatpush1.bf16.msra.mxu0 0
        %1204 = vmatprep.mubr.bf16.mxu0 0
        %1205 = vmatmul.mubr.bf16.gmra.mrb[0].mxu0 %v1167
        %v1206 = vpop.f32.mrb[0].mxu0
        %v1207 = vadd.f32 %v1052, %v1206
        %v1208 = vpop.f32.mrb[0].mxu0
        %v1209 = vpop.f32.mrb[0].mxu0
        %v1210 = vpop.f32.mrb[0].mxu0
        %1211 = vdwg.mxu0
        %v1213 = vsel %vm1118, %v1025, 0
        %v1216 = vsel %vm1122, %v1094, 0
        %1218 = vmatprep.subr.bf16.mxu0 0
        %1219 = vmatpush1.bf16.msra.mxu0 %v1216
        %1220 = vmatprep.subr.bf16.mxu0 0
        %1221 = vmatpush1.bf16.msra.mxu0 0
        %1222 = vmatprep.subr.bf16.mxu0 0
        %1223 = vmatpush1.bf16.msra.mxu0 0
        %1224 = vmatprep.subr.bf16.mxu0 0
        %1225 = vmatpush1.bf16.msra.mxu0 0
        %1226 = vmatprep.subr.bf16.mxu0 0
        %1227 = vmatpush1.bf16.msra.mxu0 0
        %1228 = vmatprep.subr.bf16.mxu0 0
        %1229 = vmatpush1.bf16.msra.mxu0 0
        %1230 = vmatprep.subr.bf16.mxu0 0
        %1231 = vmatpush1.bf16.msra.mxu0 0
        %1232 = vmatprep.subr.bf16.mxu0 0
        %1233 = vmatpush1.bf16.msra.mxu0 0
        %1234 = vmatprep.subr.bf16.mxu0 0
        %1235 = vmatpush1.bf16.msra.mxu0 0
        %1236 = vmatprep.subr.bf16.mxu0 0
        %1237 = vmatpush1.bf16.msra.mxu0 0
        %1238 = vmatprep.subr.bf16.mxu0 0
        %1239 = vmatpush1.bf16.msra.mxu0 0
        %1240 = vmatprep.subr.bf16.mxu0 0
        %1241 = vmatpush1.bf16.msra.mxu0 0
        %1242 = vmatprep.subr.bf16.mxu0 0
        %1243 = vmatpush1.bf16.msra.mxu0 0
        %1244 = vmatprep.subr.bf16.mxu0 0
        %1245 = vmatpush1.bf16.msra.mxu0 0
        %1246 = vmatprep.subr.bf16.mxu0 0
        %1247 = vmatpush1.bf16.msra.mxu0 0
        %1248 = vmatprep.subr.bf16.mxu0 0
        %1249 = vmatpush1.bf16.msra.mxu0 0
        %1250 = vmatprep.mubr.bf16.mxu0 0
        %1251 = vmatmul.mubr.bf16.gmra.mrb[0].mxu0 %v1213
        %v1252 = vpop.f32.mrb[0].mxu0
        %v1253 = vadd.f32 %v1052, %v1252
        %v1254 = vpop.f32.mrb[0].mxu0
        %v1255 = vpop.f32.mrb[0].mxu0
        %v1256 = vpop.f32.mrb[0].mxu0
        %1257 = vdwg.mxu0
        %v1259 = vsel %vm1118, %v1027, 0
        %v1262 = vsel %vm1122, %v1110, 0
        %1264 = vmatprep.subr.bf16.mxu0 0
        %1265 = vmatpush1.bf16.msra.mxu0 %v1262
        %1266 = vmatprep.subr.bf16.mxu0 0
        %1267 = vmatpush1.bf16.msra.mxu0 0
        %1268 = vmatprep.subr.bf16.mxu0 0
        %1269 = vmatpush1.bf16.msra.mxu0 0
        %1270 = vmatprep.subr.bf16.mxu0 0
        %1271 = vmatpush1.bf16.msra.mxu0 0
        %1272 = vmatprep.subr.bf16.mxu0 0
        %1273 = vmatpush1.bf16.msra.mxu0 0
        %1274 = vmatprep.subr.bf16.mxu0 0
        %1275 = vmatpush1.bf16.msra.mxu0 0
        %1276 = vmatprep.subr.bf16.mxu0 0
        %1277 = vmatpush1.bf16.msra.mxu0 0
        %1278 = vmatprep.subr.bf16.mxu0 0
        %1279 = vmatpush1.bf16.msra.mxu0 0
        %1280 = vmatprep.subr.bf16.mxu0 0
        %1281 = vmatpush1.bf16.msra.mxu0 0
        %1282 = vmatprep.subr.bf16.mxu0 0
        %1283 = vmatpush1.bf16.msra.mxu0 0
        %1284 = vmatprep.subr.bf16.mxu0 0
        %1285 = vmatpush1.bf16.msra.mxu0 0
        %1286 = vmatprep.subr.bf16.mxu0 0
        %1287 = vmatpush1.bf16.msra.mxu0 0
        %1288 = vmatprep.subr.bf16.mxu0 0
        %1289 = vmatpush1.bf16.msra.mxu0 0
        %1290 = vmatprep.subr.bf16.mxu0 0
        %1291 = vmatpush1.bf16.msra.mxu0 0
        %1292 = vmatprep.subr.bf16.mxu0 0
        %1293 = vmatpush1.bf16.msra.mxu0 0
        %1294 = vmatprep.subr.bf16.mxu0 0
        %1295 = vmatpush1.bf16.msra.mxu0 0
        %1296 = vmatprep.mubr.bf16.mxu0 0
        %1297 = vmatmul.mubr.bf16.gmra.mrb[0].mxu0 %v1259
        %v1298 = vpop.f32.mrb[0].mxu0
        %v1299 = vadd.f32 %v1052, %v1298
        %v1300 = vpop.f32.mrb[0].mxu0
        %v1301 = vpop.f32.mrb[0].mxu0
        %v1302 = vpop.f32.mrb[0].mxu0
        %1303 = vdwg.mxu0
        %v1304 = vsel %vm1118, %v1161, -inf
        %1305 = vmax.xlane.f32.xlu0 %v1304
        %v1306 = vpop.xlane.xlu0 %1305
        %v1307 = vsel %vm1118, %v1207, -inf
        %1308 = vmax.xlane.f32.xlu0 %v1307
        %v1309 = vpop.xlane.xlu0 %1308
        %v1310 = vsel %vm1118, %v1253, -inf
        %1311 = vmax.xlane.f32.xlu0 %v1310
        %v1312 = vpop.xlane.xlu0 %1311
        %v1313 = vsel %vm1118, %v1299, -inf
        %1314 = vmax.xlane.f32.xlu0 %v1313
        %v1315 = vpop.xlane.xlu0 %1314
        %v1316 = vsub.f32 -inf, %v1306
        %v1317 = vsub.f32 -inf, %v1309
        %v1318 = vsub.f32 -inf, %v1312
        %v1319 = vsub.f32 -inf, %v1315
        %v1320 = vmul.f32 %v1316, 1.442695
        %v1321 = vpow.pop %v1320
        %v1322 = vmul.f32 %v1317, 1.442695
        %v1323 = vpow.pop %v1322
        %v1324 = vmul.f32 %v1318, 1.442695
        %v1325 = vpow.pop %v1324
        %v1326 = vmul.f32 %v1319, 1.442695
        %v1327 = vpow.pop %v1326
        %v1328 = vsub.f32 %v1161, %v1306
        %v1329 = vsub.f32 %v1207, %v1309
        %v1330 = vsub.f32 %v1253, %v1312
        %v1331 = vsub.f32 %v1299, %v1315
        %v1332 = vmul.f32 %v1328, 1.442695
        %v1333 = vpow.pop %v1332
        %v1334 = vmul.f32 %v1329, 1.442695
        %v1335 = vpow.pop %v1334
        %v1336 = vmul.f32 %v1330, 1.442695
        %v1337 = vpow.pop %v1336
        %v1338 = vmul.f32 %v1331, 1.442695
        %v1339 = vpow.pop %v1338
        %v1340 = vmul.f32 %v1321, 0.0
        %v1341 = vmul.f32 %v1323, 0.0
        %v1342 = vmul.f32 %v1325, 0.0
        %v1343 = vmul.f32 %v1327, 0.0
        %v1344 = vsel %vm1118, %v1333, 0.0
        %1345 = vadd.xlane.f32.xlu0 %v1344
        %v1346 = vpop.xlane.xlu0 %1345
        %v1347 = vsel %vm1118, %v1335, 0.0
        %1348 = vadd.xlane.f32.xlu0 %v1347
        %v1349 = vpop.xlane.xlu0 %1348
        %v1350 = vsel %vm1118, %v1337, 0.0
        %1351 = vadd.xlane.f32.xlu0 %v1350
        %v1352 = vpop.xlane.xlu0 %1351
        %v1353 = vsel %vm1118, %v1339, 0.0
        %1354 = vadd.xlane.f32.xlu0 %v1353
        %v1355 = vpop.xlane.xlu0 %1354
        %v1356 = vadd.f32 %v1340, %v1346
        %v1357 = vadd.f32 %v1341, %v1349
        %v1358 = vadd.f32 %v1342, %v1352
        %v1359 = vadd.f32 %v1343, %v1355
        %v1360 = vpack.c.bf16 %v1333, %v1333
        %v1361 = vpack.c.bf16 %v1335, %v1335
        %v1362 = vpack.c.bf16 %v1337, %v1337
        %v1363 = vpack.c.bf16 %v1339, %v1339
        %v1365 = vsel %vm1118, %v1360, 0
        %v1368 = vsel %vm1122, %v1039, 0
        %1370 = vmatprep.subr.bf16.mxu0 0
        %1371 = vmatpush1.bf16.msra.mxu0 %v1368
        %1372 = vmatprep.subr.bf16.mxu0 0
        %1373 = vmatpush1.bf16.msra.mxu0 0
        %1374 = vmatprep.subr.bf16.mxu0 0
        %1375 = vmatpush1.bf16.msra.mxu0 0
        %1376 = vmatprep.subr.bf16.mxu0 0
        %1377 = vmatpush1.bf16.msra.mxu0 0
        %1378 = vmatprep.subr.bf16.mxu0 0
        %1379 = vmatpush1.bf16.msra.mxu0 0
        %1380 = vmatprep.subr.bf16.mxu0 0
        %1381 = vmatpush1.bf16.msra.mxu0 0
        %1382 = vmatprep.subr.bf16.mxu0 0
        %1383 = vmatpush1.bf16.msra.mxu0 0
        %1384 = vmatprep.subr.bf16.mxu0 0
        %1385 = vmatpush1.bf16.msra.mxu0 0
        %1386 = vmatprep.subr.bf16.mxu0 0
        %1387 = vmatpush1.bf16.msra.mxu0 0
        %1388 = vmatprep.subr.bf16.mxu0 0
        %1389 = vmatpush1.bf16.msra.mxu0 0
        %1390 = vmatprep.subr.bf16.mxu0 0
        %1391 = vmatpush1.bf16.msra.mxu0 0
        %1392 = vmatprep.subr.bf16.mxu0 0
        %1393 = vmatpush1.bf16.msra.mxu0 0
        %1394 = vmatprep.subr.bf16.mxu0 0
        %1395 = vmatpush1.bf16.msra.mxu0 0
        %1396 = vmatprep.subr.bf16.mxu0 0
        %1397 = vmatpush1.bf16.msra.mxu0 0
        %1398 = vmatprep.subr.bf16.mxu0 0
        %1399 = vmatpush1.bf16.msra.mxu0 0
        %1400 = vmatprep.subr.bf16.mxu0 0
        %1401 = vmatpush1.bf16.msra.mxu0 0
        %1402 = vmatprep.mubr.bf16.mxu0 0
        %1403 = vmatmul.mubr.bf16.gmra.mrb[0].mxu0 %v1365
        %v1404 = vpop.f32.mrb[0].mxu0
        %v1405 = vadd.f32 0.0, %v1404
        %v1406 = vpop.f32.mrb[0].mxu0
        %v1407 = vpop.f32.mrb[0].mxu0
        %v1408 = vpop.f32.mrb[0].mxu0
        %1409 = vdwg.mxu0
        %v1411 = vsel %vm1118, %v1361, 0
        %v1414 = vsel %vm1122, %v1042, 0
        %1416 = vmatprep.subr.bf16.mxu0 0
        %1417 = vmatpush1.bf16.msra.mxu0 %v1414
        %1418 = vmatprep.subr.bf16.mxu0 0
        %1419 = vmatpush1.bf16.msra.mxu0 0
        %1420 = vmatprep.subr.bf16.mxu0 0
        %1421 = vmatpush1.bf16.msra.mxu0 0
        %1422 = vmatprep.subr.bf16.mxu0 0
        %1423 = vmatpush1.bf16.msra.mxu0 0
        %1424 = vmatprep.subr.bf16.mxu0 0
        %1425 = vmatpush1.bf16.msra.mxu0 0
        %1426 = vmatprep.subr.bf16.mxu0 0
        %1427 = vmatpush1.bf16.msra.mxu0 0
        %1428 = vmatprep.subr.bf16.mxu0 0
        %1429 = vmatpush1.bf16.msra.mxu0 0
        %1430 = vmatprep.subr.bf16.mxu0 0
        %1431 = vmatpush1.bf16.msra.mxu0 0
        %1432 = vmatprep.subr.bf16.mxu0 0
        %1433 = vmatpush1.bf16.msra.mxu0 0
        %1434 = vmatprep.subr.bf16.mxu0 0
        %1435 = vmatpush1.bf16.msra.mxu0 0
        %1436 = vmatprep.subr.bf16.mxu0 0
        %1437 = vmatpush1.bf16.msra.mxu0 0
        %1438 = vmatprep.subr.bf16.mxu0 0
        %1439 = vmatpush1.bf16.msra.mxu0 0
        %1440 = vmatprep.subr.bf16.mxu0 0
        %1441 = vmatpush1.bf16.msra.mxu0 0
        %1442 = vmatprep.subr.bf16.mxu0 0
        %1443 = vmatpush1.bf16.msra.mxu0 0
        %1444 = vmatprep.subr.bf16.mxu0 0
        %1445 = vmatpush1.bf16.msra.mxu0 0
        %1446 = vmatprep.subr.bf16.mxu0 0
        %1447 = vmatpush1.bf16.msra.mxu0 0
        %1448 = vmatprep.mubr.bf16.mxu0 0
        %1449 = vmatmul.mubr.bf16.gmra.mrb[0].mxu0 %v1411
        %v1450 = vpop.f32.mrb[0].mxu0
        %v1451 = vadd.f32 0.0, %v1450
        %v1452 = vpop.f32.mrb[0].mxu0
        %v1453 = vpop.f32.mrb[0].mxu0
        %v1454 = vpop.f32.mrb[0].mxu0
        %1455 = vdwg.mxu0
        %v1457 = vsel %vm1118, %v1362, 0
        %v1460 = vsel %vm1122, %v1044, 0
        %1462 = vmatprep.subr.bf16.mxu0 0
        %1463 = vmatpush1.bf16.msra.mxu0 %v1460
        %1464 = vmatprep.subr.bf16.mxu0 0
        %1465 = vmatpush1.bf16.msra.mxu0 0
        %1466 = vmatprep.subr.bf16.mxu0 0
        %1467 = vmatpush1.bf16.msra.mxu0 0
        %1468 = vmatprep.subr.bf16.mxu0 0
        %1469 = vmatpush1.bf16.msra.mxu0 0
        %1470 = vmatprep.subr.bf16.mxu0 0
        %1471 = vmatpush1.bf16.msra.mxu0 0
        %1472 = vmatprep.subr.bf16.mxu0 0
        %1473 = vmatpush1.bf16.msra.mxu0 0
        %1474 = vmatprep.subr.bf16.mxu0 0
        %1475 = vmatpush1.bf16.msra.mxu0 0
        %1476 = vmatprep.subr.bf16.mxu0 0
        %1477 = vmatpush1.bf16.msra.mxu0 0
        %1478 = vmatprep.subr.bf16.mxu0 0
        %1479 = vmatpush1.bf16.msra.mxu0 0
        %1480 = vmatprep.subr.bf16.mxu0 0
        %1481 = vmatpush1.bf16.msra.mxu0 0
        %1482 = vmatprep.subr.bf16.mxu0 0
        %1483 = vmatpush1.bf16.msra.mxu0 0
        %1484 = vmatprep.subr.bf16.mxu0 0
        %1485 = vmatpush1.bf16.msra.mxu0 0
        %1486 = vmatprep.subr.bf16.mxu0 0
        %1487 = vmatpush1.bf16.msra.mxu0 0
        %1488 = vmatprep.subr.bf16.mxu0 0
        %1489 = vmatpush1.bf16.msra.mxu0 0
        %1490 = vmatprep.subr.bf16.mxu0 0
        %1491 = vmatpush1.bf16.msra.mxu0 0
        %1492 = vmatprep.subr.bf16.mxu0 0
        %1493 = vmatpush1.bf16.msra.mxu0 0
        %1494 = vmatprep.mubr.bf16.mxu0 0
        %1495 = vmatmul.mubr.bf16.gmra.mrb[0].mxu0 %v1457
        %v1496 = vpop.f32.mrb[0].mxu0
        %v1497 = vadd.f32 0.0, %v1496
        %v1498 = vpop.f32.mrb[0].mxu0
        %v1499 = vpop.f32.mrb[0].mxu0
        %v1500 = vpop.f32.mrb[0].mxu0
        %1501 = vdwg.mxu0
        %v1503 = vsel %vm1118, %v1363, 0
        %v1506 = vsel %vm1122, %v1046, 0
        %1508 = vmatprep.subr.bf16.mxu0 0
        %1509 = vmatpush1.bf16.msra.mxu0 %v1506
        %1510 = vmatprep.subr.bf16.mxu0 0
        %1511 = vmatpush1.bf16.msra.mxu0 0
        %1512 = vmatprep.subr.bf16.mxu0 0
        %1513 = vmatpush1.bf16.msra.mxu0 0
        %1514 = vmatprep.subr.bf16.mxu0 0
        %1515 = vmatpush1.bf16.msra.mxu0 0
        %1516 = vmatprep.subr.bf16.mxu0 0
        %1517 = vmatpush1.bf16.msra.mxu0 0
        %1518 = vmatprep.subr.bf16.mxu0 0
        %1519 = vmatpush1.bf16.msra.mxu0 0
        %1520 = vmatprep.subr.bf16.mxu0 0
        %1521 = vmatpush1.bf16.msra.mxu0 0
        %1522 = vmatprep.subr.bf16.mxu0 0
        %1523 = vmatpush1.bf16.msra.mxu0 0
        %1524 = vmatprep.subr.bf16.mxu0 0
        %1525 = vmatpush1.bf16.msra.mxu0 0
        %1526 = vmatprep.subr.bf16.mxu0 0
        %1527 = vmatpush1.bf16.msra.mxu0 0
        %1528 = vmatprep.subr.bf16.mxu0 0
        %1529 = vmatpush1.bf16.msra.mxu0 0
        %1530 = vmatprep.subr.bf16.mxu0 0
        %1531 = vmatpush1.bf16.msra.mxu0 0
        %1532 = vmatprep.subr.bf16.mxu0 0
        %1533 = vmatpush1.bf16.msra.mxu0 0
        %1534 = vmatprep.subr.bf16.mxu0 0
        %1535 = vmatpush1.bf16.msra.mxu0 0
        %1536 = vmatprep.subr.bf16.mxu0 0
        %1537 = vmatpush1.bf16.msra.mxu0 0
        %1538 = vmatprep.subr.bf16.mxu0 0
        %1539 = vmatpush1.bf16.msra.mxu0 0
        %1540 = vmatprep.mubr.bf16.mxu0 0
        %1541 = vmatmul.mubr.bf16.gmra.mrb[0].mxu0 %v1503
        %v1542 = vpop.f32.mrb[0].mxu0
        %v1543 = vadd.f32 0.0, %v1542
        %v1544 = vpop.f32.mrb[0].mxu0
        %v1545 = vpop.f32.mrb[0].mxu0
        %v1546 = vpop.f32.mrb[0].mxu0
        %1547 = vdwg.mxu0
        %v1548 = vadd.f32 %v1340, %v1405
        %v1549 = vadd.f32 %v1341, %v1451
        %v1550 = vadd.f32 %v1342, %v1497
        %v1551 = vadd.f32 %v1343, %v1543
        %v1552 = vrcp.pop %v1356
        %v1553 = vrcp.pop %v1357
        %v1554 = vrcp.pop %v1358
        %v1555 = vrcp.pop %v1359
        %v1556 = vmul.f32 %v1548, %v1552
        %v1557 = vmul.f32 %v1549, %v1553
        %v1558 = vmul.f32 %v1550, %v1554
        %v1559 = vmul.f32 %v1551, %v1555
        %v1560 = vpack.c.bf16 %v1556, %v1556
        %v1561 = vpack.c.bf16 %v1557, %v1557
        %v1562 = vpack.c.bf16 %v1558, %v1558
        %v1563 = vpack.c.bf16 %v1559, %v1559
        %v1564 = vld [vmem:[%s11] sm:$0xf]
        %v1565 = vld [vmem:[%s11 + $0x4] sm:$0xf]
        %v1566 = vld [vmem:[%s11 + $0x8] sm:$0xf]
        %v1567 = vld [vmem:[%s11 + $0xc] sm:$0xf]
        %v1569 = vsel %vm1118, %v1560, 0
        %v1572 = vsel %vm1122, %v1564, 0
        %1574 = vmatprep.subr.bf16.mxu0 0
        %1575 = vmatpush1.bf16.msra.mxu0 %v1572
        %1576 = vmatprep.subr.bf16.mxu0 0
        %1577 = vmatpush1.bf16.msra.mxu0 0
        %1578 = vmatprep.subr.bf16.mxu0 0
        %1579 = vmatpush1.bf16.msra.mxu0 0
        %1580 = vmatprep.subr.bf16.mxu0 0
        %1581 = vmatpush1.bf16.msra.mxu0 0
        %1582 = vmatprep.subr.bf16.mxu0 0
        %1583 = vmatpush1.bf16.msra.mxu0 0
        %1584 = vmatprep.subr.bf16.mxu0 0
        %1585 = vmatpush1.bf16.msra.mxu0 0
        %1586 = vmatprep.subr.bf16.mxu0 0
        %1587 = vmatpush1.bf16.msra.mxu0 0
        %1588 = vmatprep.subr.bf16.mxu0 0
        %1589 = vmatpush1.bf16.msra.mxu0 0
        %1590 = vmatprep.subr.bf16.mxu0 0
        %1591 = vmatpush1.bf16.msra.mxu0 0
        %1592 = vmatprep.subr.bf16.mxu0 0
        %1593 = vmatpush1.bf16.msra.mxu0 0
        %1594 = vmatprep.subr.bf16.mxu0 0
        %1595 = vmatpush1.bf16.msra.mxu0 0
        %1596 = vmatprep.subr.bf16.mxu0 0
        %1597 = vmatpush1.bf16.msra.mxu0 0
        %1598 = vmatprep.subr.bf16.mxu0 0
        %1599 = vmatpush1.bf16.msra.mxu0 0
        %1600 = vmatprep.subr.bf16.mxu0 0
        %1601 = vmatpush1.bf16.msra.mxu0 0
        %1602 = vmatprep.subr.bf16.mxu0 0
        %1603 = vmatpush1.bf16.msra.mxu0 0
        %1604 = vmatprep.subr.bf16.mxu0 0
        %1605 = vmatpush1.bf16.msra.mxu0 0
        %1606 = vmatprep.mubr.bf16.mxu0 0
        %1607 = vmatmul.mubr.bf16.gmra.mrb[0].mxu0 %v1569
        %v1608 = vpop.f32.mrb[0].mxu0
        %v1609 = vadd.f32 0.0, %v1608
        %v1610 = vpop.f32.mrb[0].mxu0
        %v1611 = vpop.f32.mrb[0].mxu0
        %v1612 = vpop.f32.mrb[0].mxu0
        %1613 = vdwg.mxu0
        %v1615 = vsel %vm1118, %v1561, 0
        %v1618 = vsel %vm1122, %v1565, 0
        %1620 = vmatprep.subr.bf16.mxu0 0
        %1621 = vmatpush1.bf16.msra.mxu0 %v1618
        %1622 = vmatprep.subr.bf16.mxu0 0
        %1623 = vmatpush1.bf16.msra.mxu0 0
        %1624 = vmatprep.subr.bf16.mxu0 0
        %1625 = vmatpush1.bf16.msra.mxu0 0
        %1626 = vmatprep.subr.bf16.mxu0 0
        %1627 = vmatpush1.bf16.msra.mxu0 0
        %1628 = vmatprep.subr.bf16.mxu0 0
        %1629 = vmatpush1.bf16.msra.mxu0 0
        %1630 = vmatprep.subr.bf16.mxu0 0
        %1631 = vmatpush1.bf16.msra.mxu0 0
        %1632 = vmatprep.subr.bf16.mxu0 0
        %1633 = vmatpush1.bf16.msra.mxu0 0
        %1634 = vmatprep.subr.bf16.mxu0 0
        %1635 = vmatpush1.bf16.msra.mxu0 0
        %1636 = vmatprep.subr.bf16.mxu0 0
        %1637 = vmatpush1.bf16.msra.mxu0 0
        %1638 = vmatprep.subr.bf16.mxu0 0
        %1639 = vmatpush1.bf16.msra.mxu0 0
        %1640 = vmatprep.subr.bf16.mxu0 0
        %1641 = vmatpush1.bf16.msra.mxu0 0
        %1642 = vmatprep.subr.bf16.mxu0 0
        %1643 = vmatpush1.bf16.msra.mxu0 0
        %1644 = vmatprep.subr.bf16.mxu0 0
        %1645 = vmatpush1.bf16.msra.mxu0 0
        %1646 = vmatprep.subr.bf16.mxu0 0
        %1647 = vmatpush1.bf16.msra.mxu0 0
        %1648 = vmatprep.subr.bf16.mxu0 0
        %1649 = vmatpush1.bf16.msra.mxu0 0
        %1650 = vmatprep.subr.bf16.mxu0 0
        %1651 = vmatpush1.bf16.msra.mxu0 0
        %1652 = vmatprep.mubr.bf16.mxu0 0
        %1653 = vmatmul.mubr.bf16.gmra.mrb[0].mxu0 %v1615
        %v1654 = vpop.f32.mrb[0].mxu0
        %v1655 = vadd.f32 0.0, %v1654
        %v1656 = vpop.f32.mrb[0].mxu0
        %v1657 = vpop.f32.mrb[0].mxu0
        %v1658 = vpop.f32.mrb[0].mxu0
        %1659 = vdwg.mxu0
        %v1661 = vsel %vm1118, %v1562, 0
        %v1664 = vsel %vm1122, %v1566, 0
        %1666 = vmatprep.subr.bf16.mxu0 0
        %1667 = vmatpush1.bf16.msra.mxu0 %v1664
        %1668 = vmatprep.subr.bf16.mxu0 0
        %1669 = vmatpush1.bf16.msra.mxu0 0
        %1670 = vmatprep.subr.bf16.mxu0 0
        %1671 = vmatpush1.bf16.msra.mxu0 0
        %1672 = vmatprep.subr.bf16.mxu0 0
        %1673 = vmatpush1.bf16.msra.mxu0 0
        %1674 = vmatprep.subr.bf16.mxu0 0
        %1675 = vmatpush1.bf16.msra.mxu0 0
        %1676 = vmatprep.subr.bf16.mxu0 0
        %1677 = vmatpush1.bf16.msra.mxu0 0
        %1678 = vmatprep.subr.bf16.mxu0 0
        %1679 = vmatpush1.bf16.msra.mxu0 0
        %1680 = vmatprep.subr.bf16.mxu0 0
        %1681 = vmatpush1.bf16.msra.mxu0 0
        %1682 = vmatprep.subr.bf16.mxu0 0
        %1683 = vmatpush1.bf16.msra.mxu0 0
        %1684 = vmatprep.subr.bf16.mxu0 0
        %1685 = vmatpush1.bf16.msra.mxu0 0
        %1686 = vmatprep.subr.bf16.mxu0 0
        %1687 = vmatpush1.bf16.msra.mxu0 0
        %1688 = vmatprep.subr.bf16.mxu0 0
        %1689 = vmatpush1.bf16.msra.mxu0 0
        %1690 = vmatprep.subr.bf16.mxu0 0
        %1691 = vmatpush1.bf16.msra.mxu0 0
        %1692 = vmatprep.subr.bf16.mxu0 0
        %1693 = vmatpush1.bf16.msra.mxu0 0
        %1694 = vmatprep.subr.bf16.mxu0 0
        %1695 = vmatpush1.bf16.msra.mxu0 0
        %1696 = vmatprep.subr.bf16.mxu0 0
        %1697 = vmatpush1.bf16.msra.mxu0 0
        %1698 = vmatprep.mubr.bf16.mxu0 0
        %1699 = vmatmul.mubr.bf16.gmra.mrb[0].mxu0 %v1661
        %v1700 = vpop.f32.mrb[0].mxu0
        %v1701 = vadd.f32 0.0, %v1700
        %v1702 = vpop.f32.mrb[0].mxu0
        %v1703 = vpop.f32.mrb[0].mxu0
        %v1704 = vpop.f32.mrb[0].mxu0
        %1705 = vdwg.mxu0
        %v1707 = vsel %vm1118, %v1563, 0
        %v1710 = vsel %vm1122, %v1567, 0
        %1712 = vmatprep.subr.bf16.mxu0 0
        %1713 = vmatpush1.bf16.msra.mxu0 %v1710
        %1714 = vmatprep.subr.bf16.mxu0 0
        %1715 = vmatpush1.bf16.msra.mxu0 0
        %1716 = vmatprep.subr.bf16.mxu0 0
        %1717 = vmatpush1.bf16.msra.mxu0 0
        %1718 = vmatprep.subr.bf16.mxu0 0
        %1719 = vmatpush1.bf16.msra.mxu0 0
        %1720 = vmatprep.subr.bf16.mxu0 0
        %1721 = vmatpush1.bf16.msra.mxu0 0
        %1722 = vmatprep.subr.bf16.mxu0 0
        %1723 = vmatpush1.bf16.msra.mxu0 0
        %1724 = vmatprep.subr.bf16.mxu0 0
        %1725 = vmatpush1.bf16.msra.mxu0 0
        %1726 = vmatprep.subr.bf16.mxu0 0
        %1727 = vmatpush1.bf16.msra.mxu0 0
        %1728 = vmatprep.subr.bf16.mxu0 0
        %1729 = vmatpush1.bf16.msra.mxu0 0
        %1730 = vmatprep.subr.bf16.mxu0 0
        %1731 = vmatpush1.bf16.msra.mxu0 0
        %1732 = vmatprep.subr.bf16.mxu0 0
        %1733 = vmatpush1.bf16.msra.mxu0 0
        %1734 = vmatprep.subr.bf16.mxu0 0
        %1735 = vmatpush1.bf16.msra.mxu0 0
        %1736 = vmatprep.subr.bf16.mxu0 0
        %1737 = vmatpush1.bf16.msra.mxu0 0
        %1738 = vmatprep.subr.bf16.mxu0 0
        %1739 = vmatpush1.bf16.msra.mxu0 0
        %1740 = vmatprep.subr.bf16.mxu0 0
        %1741 = vmatpush1.bf16.msra.mxu0 0
        %1742 = vmatprep.subr.bf16.mxu0 0
        %1743 = vmatpush1.bf16.msra.mxu0 0
        %1744 = vmatprep.mubr.bf16.mxu0 0
        %1745 = vmatmul.mubr.bf16.gmra.mrb[0].mxu0 %v1707
        %v1746 = vpop.f32.mrb[0].mxu0
        %v1747 = vadd.f32 0.0, %v1746
        %v1748 = vpop.f32.mrb[0].mxu0
        %v1749 = vpop.f32.mrb[0].mxu0
        %v1750 = vpop.f32.mrb[0].mxu0
        %1751 = vdwg.mxu0
        %v1752 = vsel %vm924, %v1609, 0.0
        %v1753 = vsel %vm924, %v1655, 0.0
        %v1754 = vadd.f32 %v1752, %v1753
        %v1755 = vsel %vm924, %v1701, 0.0
        %v1756 = vadd.f32 %v1754, %v1755
        %v1757 = vsel %vm924, %v1747, 0.0
        %v1758 = vadd.f32 %v1756, %v1757
        %v1759 = vld [vmem:[#allocation13] sm:$0x1]
        %v1761 = vlaneseq
        %v1762 = vshrl.u32 %v1761, 7
        %v1763 = vsub.s32 0, %v1762
        %v1764 = vrot.slane %v1759, %v1763
        %v1766 = vadd.f32 %v1758, %v1764
        %v1767 = vadd.f32 %v921, %v1766
        %v1768 = vld [vmem:[#allocation15] sm:$0x1]
        %v1769 = vld [vmem:[%s14] sm:$0x1]
        %v1770 = vsel %vm924, %v1767, 0.0
        %1771 = vadd.xlane.f32.xlu0 %v1770
        %v1772 = vpop.xlane.xlu0 %1771
        %v1773 = vmul.f32 %v1772, %v928
        %v1774 = vsub.f32 %v1767, %v1773
        %v1775 = vmul.f32 %v1774, %v1774
        %v1776 = vsel %vm924, %v1775, 0.0
        %1777 = vadd.xlane.f32.xlu0 %v1776
        %v1778 = vpop.xlane.xlu0 %1777
        %v1779 = vmul.f32 %v1778, %v928
        %v1780 = vadd.f32 %v1779, 1e-05
        %v1781 = vrsqrt.pop %v1780
        %v1782 = vmul.f32 %v1774, %v1781
        %v1784 = vlaneseq
        %v1785 = vshrl.u32 %v1784, 7
        %v1786 = vsub.s32 0, %v1785
        %v1787 = vrot.slane %v1768, %v1786
        %v1789 = vmul.f32 %v1782, %v1787
        %v1791 = vlaneseq
        %v1792 = vshrl.u32 %v1791, 7
        %v1793 = vsub.s32 0, %v1792
        %v1794 = vrot.slane %v1769, %v1793
        %v1796 = vadd.f32 %v1789, %v1794
        %v1797 = vpack.c.bf16 %v1796, %v1796
        %v1798 = vld [vmem:[%s15] sm:$0xf]
        %v1799 = vld [vmem:[%s15 + $0x4] sm:$0xf]
        %v1800 = vld [vmem:[%s15 + $0x8] sm:$0xf]
        %v1801 = vld [vmem:[%s15 + $0xc] sm:$0xf]
        %v1802 = vld [vmem:[%s16] sm:$0x1]
        %v1804 = vlaneseq
        %v1805 = vshrl.u32 %v1804, 7
        %v1806 = vsub.s32 0, %v1805
        %v1807 = vrot.slane %v1802, %v1806
        %v1813 = vunpack.c.l.b16 %v1798
        %v1814 = vunpack.c.l.b16 %v1799
        %v1815 = vunpack.c.l.b16 %v1800
        %v1816 = vunpack.c.l.b16 %v1801
        %v1817 = vpack.c.b16 %v1814, %v1813
        %v1818 = vpack.c.b16 %v1816, %v1815
        %v1822 = vsel %vm924, %v1797, 0
        %1824 = vmatprep.subr.bf16.mxu0 0
        %1825 = vmatpush1.bf16.msra.mxu0 %v1817
        %1826 = vmatprep.subr.bf16.mxu0 0
        %1827 = vmatpush1.bf16.msra.mxu0 %v1818
        %1828 = vmatprep.subr.bf16.mxu0 0
        %1829 = vmatpush1.bf16.msra.mxu0 0
        %1830 = vmatprep.subr.bf16.mxu0 0
        %1831 = vmatpush1.bf16.msra.mxu0 0
        %1832 = vmatprep.subr.bf16.mxu0 0
        %1833 = vmatpush1.bf16.msra.mxu0 0
        %1834 = vmatprep.subr.bf16.mxu0 0
        %1835 = vmatpush1.bf16.msra.mxu0 0
        %1836 = vmatprep.subr.bf16.mxu0 0
        %1837 = vmatpush1.bf16.msra.mxu0 0
        %1838 = vmatprep.subr.bf16.mxu0 0
        %1839 = vmatpush1.bf16.msra.mxu0 0
        %1840 = vmatprep.subr.bf16.mxu0 0
        %1841 = vmatpush1.bf16.msra.mxu0 0
        %1842 = vmatprep.subr.bf16.mxu0 0
        %1843 = vmatpush1.bf16.msra.mxu0 0
        %1844 = vmatprep.subr.bf16.mxu0 0
        %1845 = vmatpush1.bf16.msra.mxu0 0
        %1846 = vmatprep.subr.bf16.mxu0 0
        %1847 = vmatpush1.bf16.msra.mxu0 0
        %1848 = vmatprep.subr.bf16.mxu0 0
        %1849 = vmatpush1.bf16.msra.mxu0 0
        %1850 = vmatprep.subr.bf16.mxu0 0
        %1851 = vmatpush1.bf16.msra.mxu0 0
        %1852 = vmatprep.subr.bf16.mxu0 0
        %1853 = vmatpush1.bf16.msra.mxu0 0
        %1854 = vmatprep.subr.bf16.mxu0 0
        %1855 = vmatpush1.bf16.msra.mxu0 0
        %1856 = vmatprep.mubr.bf16.mxu0 0
        %1857 = vmatmul.mubr.bf16.gmra.mrb[0].mxu0 %v1822
        %v1858 = vpop.f32.mrb[0].mxu0
        %v1859 = vadd.f32 %v1807, %v1858
        %v1860 = vpop.f32.mrb[0].mxu0
        %v1861 = vpop.f32.mrb[0].mxu0
        %v1862 = vpop.f32.mrb[0].mxu0
        %1863 = vdwg.mxu0
        %v1864 = vmul.f32 %v1859, 1.702
        %v1865 = vxor.u32 %v1864, 2147483648
        %v1866 = vmul.f32 %v1865, 1.442695
        %v1867 = vpow.pop %v1866
        %v1868 = vadd.f32 %v1867, 1.0
        %v1869 = vrcp.pop %v1868
        %v1870 = vmul.f32 1.0, %v1869
        %v1871 = vmul.f32 %v1859, %v1870
        %v1872 = vpack.c.bf16 %v1871, %v1871
        %v1873 = vld [vmem:[%s17] sm:$0xf]
        %v1874 = vld [vmem:[%s17 + $0x4] sm:$0xf]
        %v1875 = vld [vmem:[%s17 + $0x8] sm:$0xf]
        %v1876 = vld [vmem:[%s17 + $0xc] sm:$0xf]
        %v1877 = vld [vmem:[%s17 + $0x10] sm:$0xf]
        %v1878 = vld [vmem:[%s17 + $0x14] sm:$0xf]
        %v1879 = vld [vmem:[%s17 + $0x18] sm:$0xf]
        %v1880 = vld [vmem:[%s17 + $0x1c] sm:$0xf]
        %v1881 = vld [vmem:[%s17 + $0x20] sm:$0xf]
        %v1882 = vld [vmem:[%s17 + $0x24] sm:$0xf]
        %v1883 = vld [vmem:[%s17 + $0x28] sm:$0xf]
        %v1884 = vld [vmem:[%s17 + $0x2c] sm:$0xf]
        %v1885 = vld [vmem:[%s17 + $0x30] sm:$0xf]
        %v1886 = vld [vmem:[%s17 + $0x34] sm:$0xf]
        %v1887 = vld [vmem:[%s17 + $0x38] sm:$0xf]
        %v1888 = vld [vmem:[%s17 + $0x3c] sm:$0xf]
        %v1889 = vld [vmem:[%s18] sm:$0x1]
        %v1891 = vlaneseq
        %v1892 = vshrl.u32 %v1891, 7
        %v1893 = vsub.s32 0, %v1892
        %v1894 = vrot.slane %v1889, %v1893
        %v1912 = vunpack.c.l.b16 %v1873
        %v1913 = vunpack.c.l.b16 %v1874
        %v1914 = vunpack.c.l.b16 %v1875
        %v1915 = vunpack.c.l.b16 %v1876
        %v1916 = vunpack.c.l.b16 %v1877
        %v1917 = vunpack.c.l.b16 %v1878
        %v1918 = vunpack.c.l.b16 %v1879
        %v1919 = vunpack.c.l.b16 %v1880
        %v1920 = vunpack.c.l.b16 %v1881
        %v1921 = vunpack.c.l.b16 %v1882
        %v1922 = vunpack.c.l.b16 %v1883
        %v1923 = vunpack.c.l.b16 %v1884
        %v1924 = vunpack.c.l.b16 %v1885
        %v1925 = vunpack.c.l.b16 %v1886
        %v1926 = vunpack.c.l.b16 %v1887
        %v1927 = vunpack.c.l.b16 %v1888
        %v1928 = vpack.c.b16 %v1913, %v1912
        %v1929 = vpack.c.b16 %v1915, %v1914
        %v1930 = vpack.c.b16 %v1917, %v1916
        %v1931 = vpack.c.b16 %v1919, %v1918
        %v1932 = vpack.c.b16 %v1921, %v1920
        %v1933 = vpack.c.b16 %v1923, %v1922
        %v1934 = vpack.c.b16 %v1925, %v1924
        %v1935 = vpack.c.b16 %v1927, %v1926
        %1944 = vmatprep.subr.bf16.mxu0 0
        %1945 = vmatpush1.bf16.msra.mxu0 %v1928
        %1946 = vmatprep.subr.bf16.mxu0 0
        %1947 = vmatpush1.bf16.msra.mxu0 %v1929
        %1948 = vmatprep.subr.bf16.mxu0 0
        %1949 = vmatpush1.bf16.msra.mxu0 %v1930
        %1950 = vmatprep.subr.bf16.mxu0 0
        %1951 = vmatpush1.bf16.msra.mxu0 %v1931
        %1952 = vmatprep.subr.bf16.mxu0 0
        %1953 = vmatpush1.bf16.msra.mxu0 %v1932
        %1954 = vmatprep.subr.bf16.mxu0 0
        %1955 = vmatpush1.bf16.msra.mxu0 %v1933
        %1956 = vmatprep.subr.bf16.mxu0 0
        %1957 = vmatpush1.bf16.msra.mxu0 %v1934
        %1958 = vmatprep.subr.bf16.mxu0 0
        %1959 = vmatpush1.bf16.msra.mxu0 %v1935
        %1960 = vmatprep.subr.bf16.mxu0 0
        %1961 = vmatpush1.bf16.msra.mxu0 0
        %1962 = vmatprep.subr.bf16.mxu0 0
        %1963 = vmatpush1.bf16.msra.mxu0 0
        %1964 = vmatprep.subr.bf16.mxu0 0
        %1965 = vmatpush1.bf16.msra.mxu0 0
        %1966 = vmatprep.subr.bf16.mxu0 0
        %1967 = vmatpush1.bf16.msra.mxu0 0
        %1968 = vmatprep.subr.bf16.mxu0 0
        %1969 = vmatpush1.bf16.msra.mxu0 0
        %1970 = vmatprep.subr.bf16.mxu0 0
        %1971 = vmatpush1.bf16.msra.mxu0 0
        %1972 = vmatprep.subr.bf16.mxu0 0
        %1973 = vmatpush1.bf16.msra.mxu0 0
        %1974 = vmatprep.subr.bf16.mxu0 0
        %1975 = vmatpush1.bf16.msra.mxu0 0
        %1976 = vmatprep.mubr.bf16.mxu0 0
        %1977 = vmatmul.mubr.bf16.gmra.mrb[0].mxu0 %v1872
        %v1978 = vpop.f32.mrb[0].mxu0
        %v1979 = vadd.f32 %v1894, %v1978
        %v1980 = vpop.f32.mrb[0].mxu0
        %v1981 = vpop.f32.mrb[0].mxu0
        %v1982 = vpop.f32.mrb[0].mxu0
        %1983 = vdwg.mxu0
        %v1984 = vadd.f32 %v1767, %v1979
        %1985 = vst.msk [vmem:[%s737] sm:$0xff] %vm924, %v1984
        %s1986 = sand.u32 %s477, 1
        %s1987 = scalar_lea.sflag [#allocation6], %s1986
        %s1988 = sand.u32 %s477, 1
        %s1989 = smul.addr %s1988, 8
        %s1990 = scalar_lea.vmem [#allocation16], %s1989
        // Predicated region
        $region129: #{tpu_custom_call.1} parent=95 // pred_check
          %p1991 = pneg %p487
        $region130: #{tpu_custom_call.1} parent=95 // pred_check_branch
          %1993 = sbr.rel (%p1991) target = $region132
        $region131: #{tpu_custom_call.1} parent=95 // pred_region
          %s1995 = ssub.s32 128, 128
          %1996 = vsyncadd %s1987, %s1995
          %s1997 = sadd.s32 %s44, %s43
          %s1998 = smul.addr %s1997, 128
          %s1999 = scalar_lea.hbm %s19, %s1998
          %s2001 = sshll.u32 %s1990, 4
          %s2002 = int_to_ptr.vmem [resolvable:$true] %s2001
          %2004 = dma.vmem_to_hbm [thread:$0]  %s2002, 128, %s1999, %s1987
        $region132: #{tpu_custom_call.1} parent=95 // pred_fallthru
          _
      $region96: #{tpu_custom_call.1} parent=5 // pred_fallthru
        _
      %p2005 = scmp.le.s32.totalorder 2, %s34
      // Predicated region
      $region133: #{tpu_custom_call.1} parent=5 // pred_check
        %p2006 = pneg %p2005
      $region134: #{tpu_custom_call.1} parent=5 // pred_check_branch
        %2008 = sbr.rel (%p2006) target = $region136
      $region135: #{tpu_custom_call.1} parent=5 // pred_region
        %s2009 = ssub.s32 %s34, 2
        // Predicated region
        $region137: #{tpu_custom_call.1} parent=135 // pred_check
          %p2010 = pneg %p493
        $region138: #{tpu_custom_call.1} parent=135 // pred_check_branch
          %2012 = sbr.rel (%p2010) target = $region140
        $region139: #{tpu_custom_call.1} parent=135 // pred_region
          %s2013 = sand.u32 %s478, 1
          %s2014 = scalar_lea.sflag [#allocation6], %s2013
          %s2015 = sand.u32 %s478, 1
          %s2016 = smul.addr %s2015, 8
          %s2017 = scalar_lea.vmem [#allocation16], %s2016
          %2018 = dma.done %s2014, 128
        $region140: #{tpu_custom_call.1} parent=135 // pred_fallthru
          _
      $region136: #{tpu_custom_call.1} parent=5 // pred_fallthru
        _
    $region6: #{tpu_custom_call.1} parent=1 // loop_footer
      %s38 = sadd.s32 1, %s34
    $region7: #{tpu_custom_call.1} parent=1 // loop_footer_branch
      %33 = sbr.rel target = $region3
    $region8: #{tpu_custom_call.1} parent=1 // loop_exit
      _
    %2019 = vsyncpa [#allocation5], 1
    %s2020 = scalar_lea.sflag [#allocation5], 1
    %2021 = vsyncpa %s2020, 1
    %2022 = vsyncpa [#allocation8], 1
    %2023 = vsyncpa [#allocation11], 1
    %2024 = vsyncpa [#allocation14], 1
    %2025 = vsyncpa [#allocation6], 1
    %s2026 = scalar_lea.sflag [#allocation6], 1
    %2027 = vsyncpa %s2026, 1

</llo_original>
